<compile_context>
chip_gen: v7x
topology: tpu7x:2x2x1
jax: 0.10.0
libtpu: 0.0.40
codegen_flags: <defaults>
</compile_context>

<pallas_src>
import functools

import jax
import jax.numpy as jnp
from jax import lax
from jax.experimental import pallas as pl
from jax.experimental.pallas import tpu as pltpu

KERNEL_W = 26                      # Conv1d kernel size from the module
POOL = 13                          # max_pool1d kernel == stride
# Tiles below are sized so (2 inputs x 2 buffers x tile) stays far under the
# v7x 64 MiB physical VMEM; the scoped limit is raised explicitly.
VMEM_LIMIT_BYTES = 48 * 1024 * 1024


# --------------------- Conv1d + ReLU + MaxPool1d (fused) ---------------------
def _conv_relu_pool_kernel(x_ref, w_ref, b_ref, out_ref, conv_ref,
                           *, t_pool, channels):
    # x_ref: (1, L, E); w_ref: (26, E, C) bf16; b_ref: (1, C); out: (1, T_pool, C)
    # conv_ref: VMEM (T_used, C) f32 scratch holding relu(conv) before pooling.
    t_used = t_pool * POOL
    x = x_ref[0]                                              # (L, E) f32
    acc = jnp.zeros((t_used, channels), jnp.float32)
    # conv as a sum of KERNEL_W shifted matmuls (no im2col materialization).
    for k in range(KERNEL_W):
        acc = acc + jnp.dot(x[k:k + t_used, :].astype(jnp.bfloat16),
                            w_ref[k],
                            preferred_element_type=jnp.float32)
    conv_ref[...] = jnp.maximum(acc + b_ref[...], 0.0)
    # max_pool1d(13, 13): fold 13 stride-13 strided VMEM loads with maximum.
    pooled = conv_ref[pl.ds(0, t_pool, stride=POOL), :]
    for j in range(1, POOL):
        pooled = jnp.maximum(pooled, conv_ref[pl.ds(j, t_pool, stride=POOL), :])
    out_ref[0] = pooled.astype(out_ref.dtype)


def conv_relu_pool(x, w_conv, b_conv):
    # x: (B, L, E); w_conv: (C, E, 26) [PyTorch Conv1d layout]; b_conv: (C,)
    B, L, E = x.shape
    C = w_conv.shape[0]
    t_conv = L - KERNEL_W + 1
    t_pool = t_conv // POOL                  # max_pool1d drops the remainder
    t_used = t_pool * POOL
    # w3[k, ci, co] = w_conv[co, ci, k]; bf16 operands for the MXU.
    w3 = jnp.transpose(w_conv, (2, 1, 0)).astype(jnp.bfloat16)
    b2 = b_conv.reshape(1, C).astype(jnp.float32)

    kern = functools.partial(_conv_relu_pool_kernel, t_pool=t_pool, channels=C)
    return pl.pallas_call(
        kern,
        out_shape=jax.ShapeDtypeStruct((B, t_pool, C), jnp.float32),
        grid=(B,),
        in_specs=[
            pl.BlockSpec((1, L, E), lambda b: (b, 0, 0)),
            pl.BlockSpec((KERNEL_W, E, C), lambda b: (0, 0, 0)),
            pl.BlockSpec((1, C), lambda b: (0, 0)),
        ],
        out_specs=pl.BlockSpec((1, t_pool, C), lambda b: (b, 0, 0)),
        scratch_shapes=[pltpu.VMEM((t_used, C), jnp.float32)],
        compiler_params=pltpu.CompilerParams(
            dimension_semantics=("parallel",),
            vmem_limit_bytes=VMEM_LIMIT_BYTES),
    )(x, w3, b2)


# ---------------- fused bidirectional LSTM layer (batched recurrence) --------
def _bilstm_kernel(x_ref, wih_ref, whhf_ref, whhb_ref, b_ref, out_ref,
                   gf_ref, gb_ref, hf_ref, hb_ref, *, seq_len, hidden, bb):
    # x_ref: (bb, T, D); wih_ref: (D, 8H) bf16 [fwd|bwd]; whh*_ref: (H, 4H) bf16
    # b_ref: (1, 8H) f32 (b_ih + b_hh, fwd|bwd fused)
    # out_ref: (T, bb, 2H) time-major (wrapper transposes back)
    # scratches: gf/gb (T, bb, 4H) pre-gates, hf/hb (T, bb, H) hidden sequences.
    H4 = 4 * hidden
    wih = wih_ref[...]                      # hoisted once
    bias = b_ref[...]

    # Pre-gate matmul for BOTH directions: (T, D) @ (D, 8H) per batch row.
    for b in range(bb):
        g = jnp.dot(x_ref[b].astype(jnp.bfloat16), wih,
                    preferred_element_type=jnp.float32) + bias        # (T, 8H)
        gf_ref[:, b:b + 1, :] = g[:, :H4].reshape(seq_len, 1, H4)
        gb_ref[:, b:b + 1, :] = g[:, H4:].reshape(seq_len, 1, H4)

    whh_f = whhf_ref[...]                   # recurrent weights hoisted out of
    whh_b = whhb_ref[...]                   # the time loop (stay VMEM/vreg hot)

    def cell(g, c):
        i = jax.nn.sigmoid(g[:, 0:hidden])
        f = jax.nn.sigmoid(g[:, hidden:2 * hidden])
        gg = jnp.tanh(g[:, 2 * hidden:3 * hidden])
        o = jax.nn.sigmoid(g[:, 3 * hidden:4 * hidden])
        c = f * c + i * gg
        h = o * jnp.tanh(c)
        return h, c

    def step(t, carry):
        hf, cf, hb, cb = carry              # all (bb, H) f32
        tt = seq_len - 1 - t
        gf = gf_ref[t] + jnp.dot(hf.astype(jnp.bfloat16), whh_f,
                                 preferred_element_type=jnp.float32)
        gb = gb_ref[tt] + jnp.dot(hb.astype(jnp.bfloat16), whh_b,
                                  preferred_element_type=jnp.float32)
        hf, cf = cell(gf, cf)
        hb, cb = cell(gb, cb)
        hf_ref[t] = hf                      # contiguous (bb, H) VMEM writes
        hb_ref[tt] = hb
        return hf, cf, hb, cb

    z = jnp.zeros((bb, hidden), jnp.float32)
    lax.fori_loop(0, seq_len, step, (z, z, z, z))

    # Single bulk store of the whole layer output (no per-timestep HBM stores).
    out_ref[...] = jnp.concatenate([hf_ref[...], hb_ref[...]],
                                   axis=-1).astype(out_ref.dtype)


def bilstm_layer(x, p):
    # x: (B, T, D) -> (B, T, 2H)
    B, T, D = x.shape
    H = p["w_hh_f"].shape[0]
    bb = B                                   # whole batch per block (small B)
    w_ih = jnp.concatenate([p["w_ih_f"], p["w_ih_b"]], axis=1).astype(jnp.bfloat16)
    bias = jnp.concatenate([p["b_f"], p["b_b"]], axis=1).astype(jnp.float32)
    whh_f = p["w_hh_f"].astype(jnp.bfloat16)
    whh_b = p["w_hh_b"].astype(jnp.bfloat16)

    kern = functools.partial(_bilstm_kernel, seq_len=T, hidden=H, bb=bb)
    out_tm = pl.pallas_call(
        kern,
        out_shape=jax.ShapeDtypeStruct((T, B, 2 * H), jnp.float32),
        grid=(B // bb,),
        in_specs=[
            pl.BlockSpec((bb, T, D), lambda i: (i, 0, 0)),
            pl.BlockSpec((D, 8 * H), lambda i: (0, 0)),
            pl.BlockSpec((H, 4 * H), lambda i: (0, 0)),
            pl.BlockSpec((H, 4 * H), lambda i: (0, 0)),
            pl.BlockSpec((1, 8 * H), lambda i: (0, 0)),
        ],
        out_specs=pl.BlockSpec((T, bb, 2 * H), lambda i: (0, i, 0)),
        scratch_shapes=[
            pltpu.VMEM((T, bb, 4 * H), jnp.float32),   # forward pre-gates
            pltpu.VMEM((T, bb, 4 * H), jnp.float32),   # backward pre-gates
            pltpu.VMEM((T, bb, H), jnp.float32),       # forward hidden seq
            pltpu.VMEM((T, bb, H), jnp.float32),       # backward hidden seq
        ],
        compiler_params=pltpu.CompilerParams(
            dimension_semantics=("parallel",),
            vmem_limit_bytes=VMEM_LIMIT_BYTES),
    )(x, w_ih, whh_f, whh_b, bias)
    return jnp.swapaxes(out_tm, 0, 1)        # back to (B, T, 2H)


# ------------------------------- tiled Linear --------------------------------
def _linear_kernel(x_ref, w_ref, b_ref, out_ref, acc_ref, *, relu):
    @pl.when(pl.program_id(1) == 0)
    def _():
        acc_ref[...] = jnp.zeros_like(acc_ref)

    acc_ref[...] += jnp.dot(x_ref[...].astype(jnp.bfloat16), w_ref[...],
                            preferred_element_type=jnp.float32)

    @pl.when(pl.program_id(1) == pl.num_programs(1) - 1)
    def _():
        y = acc_ref[...] + b_ref[...]
        if relu:
            y = jnp.maximum(y, 0.0)
        out_ref[...] = y.astype(out_ref.dtype)


def _pick_tile(dim, cap):
    # Full dim if it fits, else the largest 128-multiple divisor <= cap.
    if dim <= cap:
        return dim
    t = (cap // 128) * 128
    while t >= 128:
        if dim % t == 0:
            return t
        t -= 128
    return dim


def linear(x, w, b, *, relu, tn_cap=512, tk_cap=1024):
    # x: (B, K); w: (K, N); b: (N,)
    B, K = x.shape
    N = w.shape[1]
    tk = _pick_tile(K, tk_cap)
    tn = _pick_tile(N, tn_cap)
    wb = w.astype(jnp.bfloat16)
    b2 = b.reshape(1, N).astype(jnp.float32)

    return pl.pallas_call(
        functools.partial(_linear_kernel, relu=relu),
        out_shape=jax.ShapeDtypeStruct((B, N), jnp.float32),
        grid=(N // tn, K // tk),
        in_specs=[
            pl.BlockSpec((B, tk), lambda n, k: (0, k)),
            pl.BlockSpec((tk, tn), lambda n, k: (k, n)),
            pl.BlockSpec((1, tn), lambda n, k: (0, n)),
        ],
        out_specs=pl.BlockSpec((B, tn), lambda n, k: (0, n)),
        scratch_shapes=[pltpu.VMEM((B, tn), jnp.float32)],
        compiler_params=pltpu.CompilerParams(
            dimension_semantics=("parallel", "arbitrary"),
            vmem_limit_bytes=VMEM_LIMIT_BYTES),
    )(x, wb, b2)


# --------------------------------- forward -----------------------------------
def danq_forward(dna_x, params):
    # self.dropout[0] and the LSTM inter-layer dropout are identity at inference.
    # TODO(synk): training-mode dropout (stochastic masks) not implemented.
    temp = conv_relu_pool(dna_x, params["conv_w"], params["conv_b"])   # (B,T,C)
    for lp in params["lstm"]:
        temp = bilstm_layer(temp, lp)                                  # (B,T,2H)
    B = temp.shape[0]
    temp = temp.reshape(B, -1)                                         # flatten(start_dim=1)
    n = len(params["fc"])
    for i, (w, b) in enumerate(params["fc"]):
        temp = linear(temp, w, b, relu=(i != n - 1))
    return temp


# ----------------------------- pure-JAX reference -----------------------------
# Mirrors the kernel numerics (bf16 MXU operands, f32 accumulation/elementwise).
def _lstm_dir_ref(x, w_ih, w_hh, b, reverse):
    B, T, D = x.shape
    H = w_hh.shape[0]
    gates_x = jnp.dot(x.astype(jnp.bfloat16), w_ih.astype(jnp.bfloat16),
                      preferred_element_type=jnp.float32) + b

    def step(carry, g):
        h, c = carry
        g = g + jnp.dot(h.astype(jnp.bfloat16), w_hh.astype(jnp.bfloat16),
                        preferred_element_type=jnp.float32)
        i = jax.nn.sigmoid(g[:, 0:H])
        f = jax.nn.sigmoid(g[:, H:2 * H])
        gg = jnp.tanh(g[:, 2 * H:3 * H])
        o = jax.nn.sigmoid(g[:, 3 * H:4 * H])
        c = f * c + i * gg
        h = o * jnp.tanh(c)
        return (h, c), h

    gseq = jnp.swapaxes(gates_x, 0, 1)
    if reverse:
        gseq = gseq[::-1]
    (_, _), hs = lax.scan(step, (jnp.zeros((B, H), jnp.float32),
                                 jnp.zeros((B, H), jnp.float32)), gseq)
    if reverse:
        hs = hs[::-1]
    return jnp.swapaxes(hs, 0, 1)


def danq_ref(dna_x, params):
    B, L, E = dna_x.shape
    C = params["conv_w"].shape[0]
    t_pool = (L - KERNEL_W + 1) // POOL
    t_used = t_pool * POOL
    w3 = jnp.transpose(params["conv_w"], (2, 1, 0))            # (26, E, C)
    acc = jnp.zeros((B, t_used, C), jnp.float32)
    for k in range(KERNEL_W):
        acc = acc + jnp.dot(dna_x[:, k:k + t_used, :].astype(jnp.bfloat16),
                            w3[k].astype(jnp.bfloat16),
                            preferred_element_type=jnp.float32)
    conv = jnp.maximum(acc + params["conv_b"], 0.0)
    temp = conv.reshape(B, t_pool, POOL, C).max(axis=2)
    for lp in params["lstm"]:
        hf = _lstm_dir_ref(temp, lp["w_ih_f"], lp["w_hh_f"], lp["b_f"], False)
        hb = _lstm_dir_ref(temp, lp["w_ih_b"], lp["w_hh_b"], lp["b_b"], True)
        temp = jnp.concatenate([hf, hb], axis=-1)
    temp = temp.reshape(B, -1)
    n = len(params["fc"])
    for i, (w, b) in enumerate(params["fc"]):
        temp = jnp.dot(temp.astype(jnp.bfloat16), w.astype(jnp.bfloat16),
                       preferred_element_type=jnp.float32) + b
        if i != n - 1:
            temp = jnp.maximum(temp, 0.0)
    return temp


# ------------------------------ parameter init --------------------------------
def init_params(key, *, emb_size, linear_size, full_size, n_tfs):
    C = linear_size[-1]
    H = C
    keys = iter(jax.random.split(key, 64))

    def rnd(shape, scale=0.1):
        return (scale * jax.random.normal(next(keys), shape)).astype(jnp.float32)

    params = {
        "conv_w": rnd((C, emb_size, KERNEL_W)),   # PyTorch Conv1d weight layout
        "conv_b": rnd((C,)),
        "lstm": [],
        "fc": [],
    }
    in_dims = [C, 2 * H]                          # layer 0 in, layer 1 in
    for layer in range(2):
        D = in_dims[layer]
        lp = {}
        for tag in ("f", "b"):                    # forward / backward direction
            lp[f"w_ih_{tag}"] = rnd((D, 4 * H))   # gate order i, f, g, o
            lp[f"w_hh_{tag}"] = rnd((H, 4 * H))
            lp[f"b_{tag}"] = rnd((1, 4 * H))      # b_ih + b_hh fused
        params["lstm"].append(lp)
    full = list(full_size) + [n_tfs]
    for fin, fout in zip(full[:-1], full[1:]):
        params["fc"].append((rnd((fin, fout)), rnd((fout,))))
    return params


if __name__ == "__main__":
    key = jax.random.PRNGKey(0)
    B, L, E = 2, 51, 4            # L=51 -> conv length 26 -> pooled length 2
    linear_size = [8]             # conv out channels == LSTM hidden size
    full_size = [32, 16]          # 32 == T_pool * 2 * hidden = 2 * 2 * 8
    n_tfs = 5                     # len(all_tfs)

    k_x, k_p = jax.random.split(key)
    dna_x = jax.random.normal(k_x, (B, L, E), dtype=jnp.float32)
    params = init_params(k_p, emb_size=E, linear_size=linear_size,
                         full_size=full_size, n_tfs=n_tfs)

    out = jax.block_until_ready(danq_forward(dna_x, params))
    ref = jax.block_until_ready(danq_ref(dna_x, params))

    assert out.shape == (B, n_tfs), out.shape
    assert jnp.allclose(out, ref, atol=2e-3, rtol=2e-3), (out, ref)
    print("KERNEL_OK")
</pallas_src>

<mosaic_0001>
module attributes {stable_mosaic.version = 11 : i64} {
  func.func @_conv_relu_pool_kernel(%arg0: i32, %arg1: memref<1x51x4xf32, #tpu.memory_space<vmem>>, %arg2: memref<26x4x8xbf16, #tpu.memory_space<vmem>>, %arg3: memref<1x8xf32, #tpu.memory_space<vmem>>, %arg4: memref<1x2x8xf32, #tpu.memory_space<vmem>>, %arg5: memref<26x8xf32, #tpu.memory_space<vmem>>) attributes {dimension_semantics = [#tpu.dimension_semantics<parallel>], iteration_bounds = array<i64: 2>, scalar_prefetch = 0 : i64, scratch_operands = 1 : i64, tpu.core_type = #tpu.core_type<tc>, window_params = [{transform_indices = @transform_0, window_bounds = array<i64: 1, 51, 4>}, {pipeline_mode = #tpu.pipeline_mode<synchronous>, transform_indices = @transform_1, window_bounds = array<i64: 26, 4, 8>}, {pipeline_mode = #tpu.pipeline_mode<synchronous>, transform_indices = @transform_2, window_bounds = array<i64: 1, 8>}, {transform_indices = @transform_3, window_bounds = array<i64: 1, 2, 8>}]} {
    %c0 = arith.constant 0 : index
    %c0_0 = arith.constant 0 : index
    %c0_1 = arith.constant 0 : index
    %0 = vector.load %arg1[%c0, %c0_0, %c0_1] : memref<1x51x4xf32, #tpu.memory_space<vmem>>, vector<1x51x4xf32>
    %1 = vector.shape_cast %0 : vector<1x51x4xf32> to vector<51x4xf32>
    %cst = arith.constant 0.000000e+00 : f32
    %2 = vector.broadcast %cst : f32 to vector<26x8xf32>
    %3 = vector.extract_strided_slice %1 {offsets = [0, 0], sizes = [26, 4], strides = [1, 1]} : vector<51x4xf32> to vector<26x4xf32>
    %4 = arith.truncf %3 : vector<26x4xf32> to vector<26x4xbf16>
    %c0_2 = arith.constant 0 : index
    %c0_3 = arith.constant 0 : index
    %c0_4 = arith.constant 0 : index
    %5 = vector.load %arg2[%c0_2, %c0_3, %c0_4] : memref<26x4x8xbf16, #tpu.memory_space<vmem>>, vector<1x4x8xbf16>
    %6 = vector.shape_cast %5 : vector<1x4x8xbf16> to vector<4x8xbf16>
    %cst_5 = arith.constant dense<0.000000e+00> : vector<26x8xf32>
    %7 = tpu.matmul %4, %6, %cst_5 {dimension_numbers = #tpu.dot_dimension_numbers<[1], [0], [0], [1], [0, 0, 1, 1], [], []>} : vector<26x4xbf16>, vector<4x8xbf16>, vector<26x8xf32> -> vector<26x8xf32>
    %8 = arith.addf %2, %7 : vector<26x8xf32>
    %9 = vector.extract_strided_slice %1 {offsets = [1, 0], sizes = [26, 4], strides = [1, 1]} : vector<51x4xf32> to vector<26x4xf32>
    %10 = arith.truncf %9 : vector<26x4xf32> to vector<26x4xbf16>
    %c1 = arith.constant 1 : index
    %c0_6 = arith.constant 0 : index
    %c0_7 = arith.constant 0 : index
    %11 = vector.load %arg2[%c1, %c0_6, %c0_7] : memref<26x4x8xbf16, #tpu.memory_space<vmem>>, vector<1x4x8xbf16>
    %12 = vector.shape_cast %11 : vector<1x4x8xbf16> to vector<4x8xbf16>
    %cst_8 = arith.constant dense<0.000000e+00> : vector<26x8xf32>
    %13 = tpu.matmul %10, %12, %cst_8 {dimension_numbers = #tpu.dot_dimension_numbers<[1], [0], [0], [1], [0, 0, 1, 1], [], []>} : vector<26x4xbf16>, vector<4x8xbf16>, vector<26x8xf32> -> vector<26x8xf32>
    %14 = arith.addf %8, %13 : vector<26x8xf32>
    %15 = vector.extract_strided_slice %1 {offsets = [2, 0], sizes = [26, 4], strides = [1, 1]} : vector<51x4xf32> to vector<26x4xf32>
    %16 = arith.truncf %15 : vector<26x4xf32> to vector<26x4xbf16>
    %c2 = arith.constant 2 : index
    %c0_9 = arith.constant 0 : index
    %c0_10 = arith.constant 0 : index
    %17 = vector.load %arg2[%c2, %c0_9, %c0_10] : memref<26x4x8xbf16, #tpu.memory_space<vmem>>, vector<1x4x8xbf16>
    %18 = vector.shape_cast %17 : vector<1x4x8xbf16> to vector<4x8xbf16>
    %cst_11 = arith.constant dense<0.000000e+00> : vector<26x8xf32>
    %19 = tpu.matmul %16, %18, %cst_11 {dimension_numbers = #tpu.dot_dimension_numbers<[1], [0], [0], [1], [0, 0, 1, 1], [], []>} : vector<26x4xbf16>, vector<4x8xbf16>, vector<26x8xf32> -> vector<26x8xf32>
    %20 = arith.addf %14, %19 : vector<26x8xf32>
    %21 = vector.extract_strided_slice %1 {offsets = [3, 0], sizes = [26, 4], strides = [1, 1]} : vector<51x4xf32> to vector<26x4xf32>
    %22 = arith.truncf %21 : vector<26x4xf32> to vector<26x4xbf16>
    %c3 = arith.constant 3 : index
    %c0_12 = arith.constant 0 : index
    %c0_13 = arith.constant 0 : index
    %23 = vector.load %arg2[%c3, %c0_12, %c0_13] : memref<26x4x8xbf16, #tpu.memory_space<vmem>>, vector<1x4x8xbf16>
    %24 = vector.shape_cast %23 : vector<1x4x8xbf16> to vector<4x8xbf16>
    %cst_14 = arith.constant dense<0.000000e+00> : vector<26x8xf32>
    %25 = tpu.matmul %22, %24, %cst_14 {dimension_numbers = #tpu.dot_dimension_numbers<[1], [0], [0], [1], [0, 0, 1, 1], [], []>} : vector<26x4xbf16>, vector<4x8xbf16>, vector<26x8xf32> -> vector<26x8xf32>
    %26 = arith.addf %20, %25 : vector<26x8xf32>
    %27 = vector.extract_strided_slice %1 {offsets = [4, 0], sizes = [26, 4], strides = [1, 1]} : vector<51x4xf32> to vector<26x4xf32>
    %28 = arith.truncf %27 : vector<26x4xf32> to vector<26x4xbf16>
    %c4 = arith.constant 4 : index
    %c0_15 = arith.constant 0 : index
    %c0_16 = arith.constant 0 : index
    %29 = vector.load %arg2[%c4, %c0_15, %c0_16] : memref<26x4x8xbf16, #tpu.memory_space<vmem>>, vector<1x4x8xbf16>
    %30 = vector.shape_cast %29 : vector<1x4x8xbf16> to vector<4x8xbf16>
    %cst_17 = arith.constant dense<0.000000e+00> : vector<26x8xf32>
    %31 = tpu.matmul %28, %30, %cst_17 {dimension_numbers = #tpu.dot_dimension_numbers<[1], [0], [0], [1], [0, 0, 1, 1], [], []>} : vector<26x4xbf16>, vector<4x8xbf16>, vector<26x8xf32> -> vector<26x8xf32>
    %32 = arith.addf %26, %31 : vector<26x8xf32>
    %33 = vector.extract_strided_slice %1 {offsets = [5, 0], sizes = [26, 4], strides = [1, 1]} : vector<51x4xf32> to vector<26x4xf32>
    %34 = arith.truncf %33 : vector<26x4xf32> to vector<26x4xbf16>
    %c5 = arith.constant 5 : index
    %c0_18 = arith.constant 0 : index
    %c0_19 = arith.constant 0 : index
    %35 = vector.load %arg2[%c5, %c0_18, %c0_19] : memref<26x4x8xbf16, #tpu.memory_space<vmem>>, vector<1x4x8xbf16>
    %36 = vector.shape_cast %35 : vector<1x4x8xbf16> to vector<4x8xbf16>
    %cst_20 = arith.constant dense<0.000000e+00> : vector<26x8xf32>
    %37 = tpu.matmul %34, %36, %cst_20 {dimension_numbers = #tpu.dot_dimension_numbers<[1], [0], [0], [1], [0, 0, 1, 1], [], []>} : vector<26x4xbf16>, vector<4x8xbf16>, vector<26x8xf32> -> vector<26x8xf32>
    %38 = arith.addf %32, %37 : vector<26x8xf32>
    %39 = vector.extract_strided_slice %1 {offsets = [6, 0], sizes = [26, 4], strides = [1, 1]} : vector<51x4xf32> to vector<26x4xf32>
    %40 = arith.truncf %39 : vector<26x4xf32> to vector<26x4xbf16>
    %c6 = arith.constant 6 : index
    %c0_21 = arith.constant 0 : index
    %c0_22 = arith.constant 0 : index
    %41 = vector.load %arg2[%c6, %c0_21, %c0_22] : memref<26x4x8xbf16, #tpu.memory_space<vmem>>, vector<1x4x8xbf16>
    %42 = vector.shape_cast %41 : vector<1x4x8xbf16> to vector<4x8xbf16>
    %cst_23 = arith.constant dense<0.000000e+00> : vector<26x8xf32>
    %43 = tpu.matmul %40, %42, %cst_23 {dimension_numbers = #tpu.dot_dimension_numbers<[1], [0], [0], [1], [0, 0, 1, 1], [], []>} : vector<26x4xbf16>, vector<4x8xbf16>, vector<26x8xf32> -> vector<26x8xf32>
    %44 = arith.addf %38, %43 : vector<26x8xf32>
    %45 = vector.extract_strided_slice %1 {offsets = [7, 0], sizes = [26, 4], strides = [1, 1]} : vector<51x4xf32> to vector<26x4xf32>
    %46 = arith.truncf %45 : vector<26x4xf32> to vector<26x4xbf16>
    %c7 = arith.constant 7 : index
    %c0_24 = arith.constant 0 : index
    %c0_25 = arith.constant 0 : index
    %47 = vector.load %arg2[%c7, %c0_24, %c0_25] : memref<26x4x8xbf16, #tpu.memory_space<vmem>>, vector<1x4x8xbf16>
    %48 = vector.shape_cast %47 : vector<1x4x8xbf16> to vector<4x8xbf16>
    %cst_26 = arith.constant dense<0.000000e+00> : vector<26x8xf32>
    %49 = tpu.matmul %46, %48, %cst_26 {dimension_numbers = #tpu.dot_dimension_numbers<[1], [0], [0], [1], [0, 0, 1, 1], [], []>} : vector<26x4xbf16>, vector<4x8xbf16>, vector<26x8xf32> -> vector<26x8xf32>
    %50 = arith.addf %44, %49 : vector<26x8xf32>
    %51 = vector.extract_strided_slice %1 {offsets = [8, 0], sizes = [26, 4], strides = [1, 1]} : vector<51x4xf32> to vector<26x4xf32>
    %52 = arith.truncf %51 : vector<26x4xf32> to vector<26x4xbf16>
    %c8 = arith.constant 8 : index
    %c0_27 = arith.constant 0 : index
    %c0_28 = arith.constant 0 : index
    %53 = vector.load %arg2[%c8, %c0_27, %c0_28] : memref<26x4x8xbf16, #tpu.memory_space<vmem>>, vector<1x4x8xbf16>
    %54 = vector.shape_cast %53 : vector<1x4x8xbf16> to vector<4x8xbf16>
    %cst_29 = arith.constant dense<0.000000e+00> : vector<26x8xf32>
    %55 = tpu.matmul %52, %54, %cst_29 {dimension_numbers = #tpu.dot_dimension_numbers<[1], [0], [0], [1], [0, 0, 1, 1], [], []>} : vector<26x4xbf16>, vector<4x8xbf16>, vector<26x8xf32> -> vector<26x8xf32>
    %56 = arith.addf %50, %55 : vector<26x8xf32>
    %57 = vector.extract_strided_slice %1 {offsets = [9, 0], sizes = [26, 4], strides = [1, 1]} : vector<51x4xf32> to vector<26x4xf32>
    %58 = arith.truncf %57 : vector<26x4xf32> to vector<26x4xbf16>
    %c9 = arith.constant 9 : index
    %c0_30 = arith.constant 0 : index
    %c0_31 = arith.constant 0 : index
    %59 = vector.load %arg2[%c9, %c0_30, %c0_31] : memref<26x4x8xbf16, #tpu.memory_space<vmem>>, vector<1x4x8xbf16>
    %60 = vector.shape_cast %59 : vector<1x4x8xbf16> to vector<4x8xbf16>
    %cst_32 = arith.constant dense<0.000000e+00> : vector<26x8xf32>
    %61 = tpu.matmul %58, %60, %cst_32 {dimension_numbers = #tpu.dot_dimension_numbers<[1], [0], [0], [1], [0, 0, 1, 1], [], []>} : vector<26x4xbf16>, vector<4x8xbf16>, vector<26x8xf32> -> vector<26x8xf32>
    %62 = arith.addf %56, %61 : vector<26x8xf32>
    %63 = vector.extract_strided_slice %1 {offsets = [10, 0], sizes = [26, 4], strides = [1, 1]} : vector<51x4xf32> to vector<26x4xf32>
    %64 = arith.truncf %63 : vector<26x4xf32> to vector<26x4xbf16>
    %c10 = arith.constant 10 : index
    %c0_33 = arith.constant 0 : index
    %c0_34 = arith.constant 0 : index
    %65 = vector.load %arg2[%c10, %c0_33, %c0_34] : memref<26x4x8xbf16, #tpu.memory_space<vmem>>, vector<1x4x8xbf16>
    %66 = vector.shape_cast %65 : vector<1x4x8xbf16> to vector<4x8xbf16>
    %cst_35 = arith.constant dense<0.000000e+00> : vector<26x8xf32>
    %67 = tpu.matmul %64, %66, %cst_35 {dimension_numbers = #tpu.dot_dimension_numbers<[1], [0], [0], [1], [0, 0, 1, 1], [], []>} : vector<26x4xbf16>, vector<4x8xbf16>, vector<26x8xf32> -> vector<26x8xf32>
    %68 = arith.addf %62, %67 : vector<26x8xf32>
    %69 = vector.extract_strided_slice %1 {offsets = [11, 0], sizes = [26, 4], strides = [1, 1]} : vector<51x4xf32> to vector<26x4xf32>
    %70 = arith.truncf %69 : vector<26x4xf32> to vector<26x4xbf16>
    %c11 = arith.constant 11 : index
    %c0_36 = arith.constant 0 : index
    %c0_37 = arith.constant 0 : index
    %71 = vector.load %arg2[%c11, %c0_36, %c0_37] : memref<26x4x8xbf16, #tpu.memory_space<vmem>>, vector<1x4x8xbf16>
    %72 = vector.shape_cast %71 : vector<1x4x8xbf16> to vector<4x8xbf16>
    %cst_38 = arith.constant dense<0.000000e+00> : vector<26x8xf32>
    %73 = tpu.matmul %70, %72, %cst_38 {dimension_numbers = #tpu.dot_dimension_numbers<[1], [0], [0], [1], [0, 0, 1, 1], [], []>} : vector<26x4xbf16>, vector<4x8xbf16>, vector<26x8xf32> -> vector<26x8xf32>
    %74 = arith.addf %68, %73 : vector<26x8xf32>
    %75 = vector.extract_strided_slice %1 {offsets = [12, 0], sizes = [26, 4], strides = [1, 1]} : vector<51x4xf32> to vector<26x4xf32>
    %76 = arith.truncf %75 : vector<26x4xf32> to vector<26x4xbf16>
    %c12 = arith.constant 12 : index
    %c0_39 = arith.constant 0 : index
    %c0_40 = arith.constant 0 : index
    %77 = vector.load %arg2[%c12, %c0_39, %c0_40] : memref<26x4x8xbf16, #tpu.memory_space<vmem>>, vector<1x4x8xbf16>
    %78 = vector.shape_cast %77 : vector<1x4x8xbf16> to vector<4x8xbf16>
    %cst_41 = arith.constant dense<0.000000e+00> : vector<26x8xf32>
    %79 = tpu.matmul %76, %78, %cst_41 {dimension_numbers = #tpu.dot_dimension_numbers<[1], [0], [0], [1], [0, 0, 1, 1], [], []>} : vector<26x4xbf16>, vector<4x8xbf16>, vector<26x8xf32> -> vector<26x8xf32>
    %80 = arith.addf %74, %79 : vector<26x8xf32>
    %81 = vector.extract_strided_slice %1 {offsets = [13, 0], sizes = [26, 4], strides = [1, 1]} : vector<51x4xf32> to vector<26x4xf32>
    %82 = arith.truncf %81 : vector<26x4xf32> to vector<26x4xbf16>
    %c13 = arith.constant 13 : index
    %c0_42 = arith.constant 0 : index
    %c0_43 = arith.constant 0 : index
    %83 = vector.load %arg2[%c13, %c0_42, %c0_43] : memref<26x4x8xbf16, #tpu.memory_space<vmem>>, vector<1x4x8xbf16>
    %84 = vector.shape_cast %83 : vector<1x4x8xbf16> to vector<4x8xbf16>
    %cst_44 = arith.constant dense<0.000000e+00> : vector<26x8xf32>
    %85 = tpu.matmul %82, %84, %cst_44 {dimension_numbers = #tpu.dot_dimension_numbers<[1], [0], [0], [1], [0, 0, 1, 1], [], []>} : vector<26x4xbf16>, vector<4x8xbf16>, vector<26x8xf32> -> vector<26x8xf32>
    %86 = arith.addf %80, %85 : vector<26x8xf32>
    %87 = vector.extract_strided_slice %1 {offsets = [14, 0], sizes = [26, 4], strides = [1, 1]} : vector<51x4xf32> to vector<26x4xf32>
    %88 = arith.truncf %87 : vector<26x4xf32> to vector<26x4xbf16>
    %c14 = arith.constant 14 : index
    %c0_45 = arith.constant 0 : index
    %c0_46 = arith.constant 0 : index
    %89 = vector.load %arg2[%c14, %c0_45, %c0_46] : memref<26x4x8xbf16, #tpu.memory_space<vmem>>, vector<1x4x8xbf16>
    %90 = vector.shape_cast %89 : vector<1x4x8xbf16> to vector<4x8xbf16>
    %cst_47 = arith.constant dense<0.000000e+00> : vector<26x8xf32>
    %91 = tpu.matmul %88, %90, %cst_47 {dimension_numbers = #tpu.dot_dimension_numbers<[1], [0], [0], [1], [0, 0, 1, 1], [], []>} : vector<26x4xbf16>, vector<4x8xbf16>, vector<26x8xf32> -> vector<26x8xf32>
    %92 = arith.addf %86, %91 : vector<26x8xf32>
    %93 = vector.extract_strided_slice %1 {offsets = [15, 0], sizes = [26, 4], strides = [1, 1]} : vector<51x4xf32> to vector<26x4xf32>
    %94 = arith.truncf %93 : vector<26x4xf32> to vector<26x4xbf16>
    %c15 = arith.constant 15 : index
    %c0_48 = arith.constant 0 : index
    %c0_49 = arith.constant 0 : index
    %95 = vector.load %arg2[%c15, %c0_48, %c0_49] : memref<26x4x8xbf16, #tpu.memory_space<vmem>>, vector<1x4x8xbf16>
    %96 = vector.shape_cast %95 : vector<1x4x8xbf16> to vector<4x8xbf16>
    %cst_50 = arith.constant dense<0.000000e+00> : vector<26x8xf32>
    %97 = tpu.matmul %94, %96, %cst_50 {dimension_numbers = #tpu.dot_dimension_numbers<[1], [0], [0], [1], [0, 0, 1, 1], [], []>} : vector<26x4xbf16>, vector<4x8xbf16>, vector<26x8xf32> -> vector<26x8xf32>
    %98 = arith.addf %92, %97 : vector<26x8xf32>
    %99 = vector.extract_strided_slice %1 {offsets = [16, 0], sizes = [26, 4], strides = [1, 1]} : vector<51x4xf32> to vector<26x4xf32>
    %100 = arith.truncf %99 : vector<26x4xf32> to vector<26x4xbf16>
    %c16 = arith.constant 16 : index
    %c0_51 = arith.constant 0 : index
    %c0_52 = arith.constant 0 : index
    %101 = vector.load %arg2[%c16, %c0_51, %c0_52] : memref<26x4x8xbf16, #tpu.memory_space<vmem>>, vector<1x4x8xbf16>
    %102 = vector.shape_cast %101 : vector<1x4x8xbf16> to vector<4x8xbf16>
    %cst_53 = arith.constant dense<0.000000e+00> : vector<26x8xf32>
    %103 = tpu.matmul %100, %102, %cst_53 {dimension_numbers = #tpu.dot_dimension_numbers<[1], [0], [0], [1], [0, 0, 1, 1], [], []>} : vector<26x4xbf16>, vector<4x8xbf16>, vector<26x8xf32> -> vector<26x8xf32>
    %104 = arith.addf %98, %103 : vector<26x8xf32>
    %105 = vector.extract_strided_slice %1 {offsets = [17, 0], sizes = [26, 4], strides = [1, 1]} : vector<51x4xf32> to vector<26x4xf32>
    %106 = arith.truncf %105 : vector<26x4xf32> to vector<26x4xbf16>
    %c17 = arith.constant 17 : index
    %c0_54 = arith.constant 0 : index
    %c0_55 = arith.constant 0 : index
    %107 = vector.load %arg2[%c17, %c0_54, %c0_55] : memref<26x4x8xbf16, #tpu.memory_space<vmem>>, vector<1x4x8xbf16>
    %108 = vector.shape_cast %107 : vector<1x4x8xbf16> to vector<4x8xbf16>
    %cst_56 = arith.constant dense<0.000000e+00> : vector<26x8xf32>
    %109 = tpu.matmul %106, %108, %cst_56 {dimension_numbers = #tpu.dot_dimension_numbers<[1], [0], [0], [1], [0, 0, 1, 1], [], []>} : vector<26x4xbf16>, vector<4x8xbf16>, vector<26x8xf32> -> vector<26x8xf32>
    %110 = arith.addf %104, %109 : vector<26x8xf32>
    %111 = vector.extract_strided_slice %1 {offsets = [18, 0], sizes = [26, 4], strides = [1, 1]} : vector<51x4xf32> to vector<26x4xf32>
    %112 = arith.truncf %111 : vector<26x4xf32> to vector<26x4xbf16>
    %c18 = arith.constant 18 : index
    %c0_57 = arith.constant 0 : index
    %c0_58 = arith.constant 0 : index
    %113 = vector.load %arg2[%c18, %c0_57, %c0_58] : memref<26x4x8xbf16, #tpu.memory_space<vmem>>, vector<1x4x8xbf16>
    %114 = vector.shape_cast %113 : vector<1x4x8xbf16> to vector<4x8xbf16>
    %cst_59 = arith.constant dense<0.000000e+00> : vector<26x8xf32>
    %115 = tpu.matmul %112, %114, %cst_59 {dimension_numbers = #tpu.dot_dimension_numbers<[1], [0], [0], [1], [0, 0, 1, 1], [], []>} : vector<26x4xbf16>, vector<4x8xbf16>, vector<26x8xf32> -> vector<26x8xf32>
    %116 = arith.addf %110, %115 : vector<26x8xf32>
    %117 = vector.extract_strided_slice %1 {offsets = [19, 0], sizes = [26, 4], strides = [1, 1]} : vector<51x4xf32> to vector<26x4xf32>
    %118 = arith.truncf %117 : vector<26x4xf32> to vector<26x4xbf16>
    %c19 = arith.constant 19 : index
    %c0_60 = arith.constant 0 : index
    %c0_61 = arith.constant 0 : index
    %119 = vector.load %arg2[%c19, %c0_60, %c0_61] : memref<26x4x8xbf16, #tpu.memory_space<vmem>>, vector<1x4x8xbf16>
    %120 = vector.shape_cast %119 : vector<1x4x8xbf16> to vector<4x8xbf16>
    %cst_62 = arith.constant dense<0.000000e+00> : vector<26x8xf32>
    %121 = tpu.matmul %118, %120, %cst_62 {dimension_numbers = #tpu.dot_dimension_numbers<[1], [0], [0], [1], [0, 0, 1, 1], [], []>} : vector<26x4xbf16>, vector<4x8xbf16>, vector<26x8xf32> -> vector<26x8xf32>
    %122 = arith.addf %116, %121 : vector<26x8xf32>
    %123 = vector.extract_strided_slice %1 {offsets = [20, 0], sizes = [26, 4], strides = [1, 1]} : vector<51x4xf32> to vector<26x4xf32>
    %124 = arith.truncf %123 : vector<26x4xf32> to vector<26x4xbf16>
    %c20 = arith.constant 20 : index
    %c0_63 = arith.constant 0 : index
    %c0_64 = arith.constant 0 : index
    %125 = vector.load %arg2[%c20, %c0_63, %c0_64] : memref<26x4x8xbf16, #tpu.memory_space<vmem>>, vector<1x4x8xbf16>
    %126 = vector.shape_cast %125 : vector<1x4x8xbf16> to vector<4x8xbf16>
    %cst_65 = arith.constant dense<0.000000e+00> : vector<26x8xf32>
    %127 = tpu.matmul %124, %126, %cst_65 {dimension_numbers = #tpu.dot_dimension_numbers<[1], [0], [0], [1], [0, 0, 1, 1], [], []>} : vector<26x4xbf16>, vector<4x8xbf16>, vector<26x8xf32> -> vector<26x8xf32>
    %128 = arith.addf %122, %127 : vector<26x8xf32>
    %129 = vector.extract_strided_slice %1 {offsets = [21, 0], sizes = [26, 4], strides = [1, 1]} : vector<51x4xf32> to vector<26x4xf32>
    %130 = arith.truncf %129 : vector<26x4xf32> to vector<26x4xbf16>
    %c21 = arith.constant 21 : index
    %c0_66 = arith.constant 0 : index
    %c0_67 = arith.constant 0 : index
    %131 = vector.load %arg2[%c21, %c0_66, %c0_67] : memref<26x4x8xbf16, #tpu.memory_space<vmem>>, vector<1x4x8xbf16>
    %132 = vector.shape_cast %131 : vector<1x4x8xbf16> to vector<4x8xbf16>
    %cst_68 = arith.constant dense<0.000000e+00> : vector<26x8xf32>
    %133 = tpu.matmul %130, %132, %cst_68 {dimension_numbers = #tpu.dot_dimension_numbers<[1], [0], [0], [1], [0, 0, 1, 1], [], []>} : vector<26x4xbf16>, vector<4x8xbf16>, vector<26x8xf32> -> vector<26x8xf32>
    %134 = arith.addf %128, %133 : vector<26x8xf32>
    %135 = vector.extract_strided_slice %1 {offsets = [22, 0], sizes = [26, 4], strides = [1, 1]} : vector<51x4xf32> to vector<26x4xf32>
    %136 = arith.truncf %135 : vector<26x4xf32> to vector<26x4xbf16>
    %c22 = arith.constant 22 : index
    %c0_69 = arith.constant 0 : index
    %c0_70 = arith.constant 0 : index
    %137 = vector.load %arg2[%c22, %c0_69, %c0_70] : memref<26x4x8xbf16, #tpu.memory_space<vmem>>, vector<1x4x8xbf16>
    %138 = vector.shape_cast %137 : vector<1x4x8xbf16> to vector<4x8xbf16>
    %cst_71 = arith.constant dense<0.000000e+00> : vector<26x8xf32>
    %139 = tpu.matmul %136, %138, %cst_71 {dimension_numbers = #tpu.dot_dimension_numbers<[1], [0], [0], [1], [0, 0, 1, 1], [], []>} : vector<26x4xbf16>, vector<4x8xbf16>, vector<26x8xf32> -> vector<26x8xf32>
    %140 = arith.addf %134, %139 : vector<26x8xf32>
    %141 = vector.extract_strided_slice %1 {offsets = [23, 0], sizes = [26, 4], strides = [1, 1]} : vector<51x4xf32> to vector<26x4xf32>
    %142 = arith.truncf %141 : vector<26x4xf32> to vector<26x4xbf16>
    %c23 = arith.constant 23 : index
    %c0_72 = arith.constant 0 : index
    %c0_73 = arith.constant 0 : index
    %143 = vector.load %arg2[%c23, %c0_72, %c0_73] : memref<26x4x8xbf16, #tpu.memory_space<vmem>>, vector<1x4x8xbf16>
    %144 = vector.shape_cast %143 : vector<1x4x8xbf16> to vector<4x8xbf16>
    %cst_74 = arith.constant dense<0.000000e+00> : vector<26x8xf32>
    %145 = tpu.matmul %142, %144, %cst_74 {dimension_numbers = #tpu.dot_dimension_numbers<[1], [0], [0], [1], [0, 0, 1, 1], [], []>} : vector<26x4xbf16>, vector<4x8xbf16>, vector<26x8xf32> -> vector<26x8xf32>
    %146 = arith.addf %140, %145 : vector<26x8xf32>
    %147 = vector.extract_strided_slice %1 {offsets = [24, 0], sizes = [26, 4], strides = [1, 1]} : vector<51x4xf32> to vector<26x4xf32>
    %148 = arith.truncf %147 : vector<26x4xf32> to vector<26x4xbf16>
    %c24 = arith.constant 24 : index
    %c0_75 = arith.constant 0 : index
    %c0_76 = arith.constant 0 : index
    %149 = vector.load %arg2[%c24, %c0_75, %c0_76] : memref<26x4x8xbf16, #tpu.memory_space<vmem>>, vector<1x4x8xbf16>
    %150 = vector.shape_cast %149 : vector<1x4x8xbf16> to vector<4x8xbf16>
    %cst_77 = arith.constant dense<0.000000e+00> : vector<26x8xf32>
    %151 = tpu.matmul %148, %150, %cst_77 {dimension_numbers = #tpu.dot_dimension_numbers<[1], [0], [0], [1], [0, 0, 1, 1], [], []>} : vector<26x4xbf16>, vector<4x8xbf16>, vector<26x8xf32> -> vector<26x8xf32>
    %152 = arith.addf %146, %151 : vector<26x8xf32>
    %153 = vector.extract_strided_slice %1 {offsets = [25, 0], sizes = [26, 4], strides = [1, 1]} : vector<51x4xf32> to vector<26x4xf32>
    %154 = arith.truncf %153 : vector<26x4xf32> to vector<26x4xbf16>
    %c25 = arith.constant 25 : index
    %c0_78 = arith.constant 0 : index
    %c0_79 = arith.constant 0 : index
    %155 = vector.load %arg2[%c25, %c0_78, %c0_79] : memref<26x4x8xbf16, #tpu.memory_space<vmem>>, vector<1x4x8xbf16>
    %156 = vector.shape_cast %155 : vector<1x4x8xbf16> to vector<4x8xbf16>
    %cst_80 = arith.constant dense<0.000000e+00> : vector<26x8xf32>
    %157 = tpu.matmul %154, %156, %cst_80 {dimension_numbers = #tpu.dot_dimension_numbers<[1], [0], [0], [1], [0, 0, 1, 1], [], []>} : vector<26x4xbf16>, vector<4x8xbf16>, vector<26x8xf32> -> vector<26x8xf32>
    %158 = arith.addf %152, %157 : vector<26x8xf32>
    %c0_81 = arith.constant 0 : index
    %c0_82 = arith.constant 0 : index
    %159 = vector.load %arg3[%c0_81, %c0_82] : memref<1x8xf32, #tpu.memory_space<vmem>>, vector<1x8xf32>
    %160 = vector.broadcast %159 : vector<1x8xf32> to vector<26x8xf32>
    %161 = arith.addf %158, %160 : vector<26x8xf32>
    %cst_83 = arith.constant 0.000000e+00 : f32
    %162 = vector.broadcast %cst_83 : f32 to vector<26x8xf32>
    %163 = arith.maximumf %161, %162 : vector<26x8xf32>
    %c0_84 = arith.constant 0 : index
    %c0_85 = arith.constant 0 : index
    %164 = vector.load %arg5[%c0_84, %c0_85] : memref<26x8xf32, #tpu.memory_space<vmem>>, vector<26x8xf32>
    tpu.vector_store %arg5[%c0_84, %c0_85], %163 {strides = array<i32>} : memref<26x8xf32, #tpu.memory_space<vmem>>, vector<26x8xf32>,
    %c0_86 = arith.constant 0 : index
    %c0_87 = arith.constant 0 : index
    %165 = tpu.strided_load %arg5[%c0_86, %c0_87] {strides = array<i32: 13, 1>} : memref<26x8xf32, #tpu.memory_space<vmem>>, vector<2x8xf32>
    %c1_88 = arith.constant 1 : index
    %c0_89 = arith.constant 0 : index
    %166 = tpu.strided_load %arg5[%c1_88, %c0_89] {strides = array<i32: 13, 1>} : memref<26x8xf32, #tpu.memory_space<vmem>>, vector<2x8xf32>
    %167 = arith.maximumf %165, %166 : vector<2x8xf32>
    %c2_90 = arith.constant 2 : index
    %c0_91 = arith.constant 0 : index
    %168 = tpu.strided_load %arg5[%c2_90, %c0_91] {strides = array<i32: 13, 1>} : memref<26x8xf32, #tpu.memory_space<vmem>>, vector<2x8xf32>
    %169 = arith.maximumf %167, %168 : vector<2x8xf32>
    %c3_92 = arith.constant 3 : index
    %c0_93 = arith.constant 0 : index
    %170 = tpu.strided_load %arg5[%c3_92, %c0_93] {strides = array<i32: 13, 1>} : memref<26x8xf32, #tpu.memory_space<vmem>>, vector<2x8xf32>
    %171 = arith.maximumf %169, %170 : vector<2x8xf32>
    %c4_94 = arith.constant 4 : index
    %c0_95 = arith.constant 0 : index
    %172 = tpu.strided_load %arg5[%c4_94, %c0_95] {strides = array<i32: 13, 1>} : memref<26x8xf32, #tpu.memory_space<vmem>>, vector<2x8xf32>
    %173 = arith.maximumf %171, %172 : vector<2x8xf32>
    %c5_96 = arith.constant 5 : index
    %c0_97 = arith.constant 0 : index
    %174 = tpu.strided_load %arg5[%c5_96, %c0_97] {strides = array<i32: 13, 1>} : memref<26x8xf32, #tpu.memory_space<vmem>>, vector<2x8xf32>
    %175 = arith.maximumf %173, %174 : vector<2x8xf32>
    %c6_98 = arith.constant 6 : index
    %c0_99 = arith.constant 0 : index
    %176 = tpu.strided_load %arg5[%c6_98, %c0_99] {strides = array<i32: 13, 1>} : memref<26x8xf32, #tpu.memory_space<vmem>>, vector<2x8xf32>
    %177 = arith.maximumf %175, %176 : vector<2x8xf32>
    %c7_100 = arith.constant 7 : index
    %c0_101 = arith.constant 0 : index
    %178 = tpu.strided_load %arg5[%c7_100, %c0_101] {strides = array<i32: 13, 1>} : memref<26x8xf32, #tpu.memory_space<vmem>>, vector<2x8xf32>
    %179 = arith.maximumf %177, %178 : vector<2x8xf32>
    %c8_102 = arith.constant 8 : index
    %c0_103 = arith.constant 0 : index
    %180 = tpu.strided_load %arg5[%c8_102, %c0_103] {strides = array<i32: 13, 1>} : memref<26x8xf32, #tpu.memory_space<vmem>>, vector<2x8xf32>
    %181 = arith.maximumf %179, %180 : vector<2x8xf32>
    %c9_104 = arith.constant 9 : index
    %c0_105 = arith.constant 0 : index
    %182 = tpu.strided_load %arg5[%c9_104, %c0_105] {strides = array<i32: 13, 1>} : memref<26x8xf32, #tpu.memory_space<vmem>>, vector<2x8xf32>
    %183 = arith.maximumf %181, %182 : vector<2x8xf32>
    %c10_106 = arith.constant 10 : index
    %c0_107 = arith.constant 0 : index
    %184 = tpu.strided_load %arg5[%c10_106, %c0_107] {strides = array<i32: 13, 1>} : memref<26x8xf32, #tpu.memory_space<vmem>>, vector<2x8xf32>
    %185 = arith.maximumf %183, %184 : vector<2x8xf32>
    %c11_108 = arith.constant 11 : index
    %c0_109 = arith.constant 0 : index
    %186 = tpu.strided_load %arg5[%c11_108, %c0_109] {strides = array<i32: 13, 1>} : memref<26x8xf32, #tpu.memory_space<vmem>>, vector<2x8xf32>
    %187 = arith.maximumf %185, %186 : vector<2x8xf32>
    %c12_110 = arith.constant 12 : index
    %c0_111 = arith.constant 0 : index
    %188 = tpu.strided_load %arg5[%c12_110, %c0_111] {strides = array<i32: 13, 1>} : memref<26x8xf32, #tpu.memory_space<vmem>>, vector<2x8xf32>
    %189 = arith.maximumf %187, %188 : vector<2x8xf32>
    %c0_112 = arith.constant 0 : index
    %c0_113 = arith.constant 0 : index
    %c0_114 = arith.constant 0 : index
    %190 = vector.load %arg4[%c0_112, %c0_113, %c0_114] : memref<1x2x8xf32, #tpu.memory_space<vmem>>, vector<1x2x8xf32>
    %191 = vector.shape_cast %190 : vector<1x2x8xf32> to vector<2x8xf32>
    %192 = vector.shape_cast %189 : vector<2x8xf32> to vector<1x2x8xf32>
    tpu.vector_store %arg4[%c0_112, %c0_113, %c0_114], %192 {strides = array<i32>} : memref<1x2x8xf32, #tpu.memory_space<vmem>>, vector<1x2x8xf32>,
    return
  }
  func.func @transform_0(%arg0: i32) -> (i32, i32, i32) {
    %c0_i32 = arith.constant 0 : i32
    %c0_i32_0 = arith.constant 0 : i32
    %c0_i32_1 = arith.constant 0 : i32
    return %arg0, %c0_i32, %c0_i32_0 : i32, i32, i32
  }
  func.func @transform_1(%arg0: i32) -> (i32, i32, i32) {
    %c0_i32 = arith.constant 0 : i32
    %c0_i32_0 = arith.constant 0 : i32
    %c0_i32_1 = arith.constant 0 : i32
    %c0_i32_2 = arith.constant 0 : i32
    return %c0_i32, %c0_i32_0, %c0_i32_1 : i32, i32, i32
  }
  func.func @transform_2(%arg0: i32) -> (i32, i32) {
    %c0_i32 = arith.constant 0 : i32
    %c0_i32_0 = arith.constant 0 : i32
    %c0_i32_1 = arith.constant 0 : i32
    return %c0_i32, %c0_i32_0 : i32, i32
  }
  func.func @transform_3(%arg0: i32) -> (i32, i32, i32) {
    %c0_i32 = arith.constant 0 : i32
    %c0_i32_0 = arith.constant 0 : i32
    %c0_i32_1 = arith.constant 0 : i32
    return %arg0, %c0_i32, %c0_i32_0 : i32, i32, i32
  }
}

</mosaic_0001>

<llo_original>
// kernel: tpu_custom_call.1
$region0: #{tpu_custom_call.1}
  #allocation0 [shape = 'u32[]', space=smem, size = 0x4, offset = 0x4, fixed_abs, tag = 'smem constant byte address 0x4 - core index']
  #allocation1 [shape = 'u32[144,128]{1,0:T(1,128)}', space=vmem, size = 0x12000, scoped, tag = 'internal scratch']
  #allocation2 [shape = 'f32[26,8]{1,0:T(8,128)}', space=vmem, size = 0x4000, scoped, tag = 'scratch operand']
  %s0 = inlined_call_operand.vmem [shape: f32[2,51,4], index: 0, kind: input, shape index: {}]
  %s1 = inlined_call_operand.vmem [shape: bf16[26,4,8], index: 1, kind: input, shape index: {}]
  %s2 = inlined_call_operand.vmem [shape: f32[1,8], index: 2, kind: input, shape index: {}]
  %s3 = inlined_call_operand.hbm [shape: f32[2,2,8], index: 3, kind: output, shape index: {}]
  %s4 = sld [smem:[#allocation0]]
  $region45: #{tpu_custom_call.1} parent=0
    _
  %s6 = ssub.s32 1, %s4
  %s7 = scalar_select 0, %s6, %s4
  $region1: #{tpu_custom_call.1} parent=0
    #allocation3 [shape = 'u8[2048]{0}', space=vmem, size = 0x800, scoped, tag = 'output window, operand 0']
    #allocation4 [shape = 's32[2]{0}', space=sflag, size = 0x8, scoped, tag = 'scoped memory for tpu_custom_call.1']
    %8 = vsyncpa [#allocation4], 0
    %s9 = scalar_lea.sflag [#allocation4], 1
    %10 = vsyncpa %s9, 0
    loop: start=0, step=1, limit=4
    $region2: #{tpu_custom_call.1} parent=1 // loop_pre_header
      _
    $region3: #{tpu_custom_call.1} parent=1 // loop_header
      %s12 = sphi 0, %s16
      %p13 = scmp.ge.s32.totalorder %s12, 4
      %s22 = sphi 0, %s24
      %s25 = sphi 0, %s22
      %s26 = sphi 0, %s25
      %s42 = sphi 0, %s26
      %s46 = sphi 0, %s46
      %s48 = sphi 0, %s46
      %s49 = sphi 0, %s48
      %s63 = sphi 0, %s49
      %s67 = sphi 0, %s67
      %s69 = sphi 0, %s67
      %s70 = sphi 0, %s69
      %s84 = sphi 0, %s70
      %s90 = sphi 0, %s92
      %s93 = sphi 0, %s90
      %s94 = sphi 0, %s93
      %s110 = sphi 0, %s94
    $region4: #{tpu_custom_call.1} parent=1 // loop_header_branch
      %15 = sbr.rel (%p13) target = $region8
    $region5: #{tpu_custom_call.1} parent=1 // loop_body
      %s17 = ssub.s32 %s12, 1
      %s18 = ssub.s32 %s12, 2
      %s19 = sadd.s32 %s12, 1
      %s20 = ssub.s32 %s12, %s19
      %p21 = scmp.eq.s32.totalorder %s20, 0
      %s23 = sadd.s32 %s22, 1
      %s24 = scalar_select %p21, %s22, %s23
      %p27 = pneg %p21
      %p28 = scmp.eq.s32.totalorder %s12, 1
      %p29 = por %p27, %p28
      %p30 = scmp.ne.s32.totalorder %s22, %s25
      %p31 = scmp.eq.s32.totalorder %s12, 0
      %p32 = por %p30, %p31
      %p33 = scmp.ne.s32.totalorder %s22, %s25
      %p34 = scmp.eq.s32.totalorder %s17, 1
      %p35 = por %p33, %p34
      %p36 = scmp.ne.s32.totalorder %s25, %s26
      %p37 = scmp.eq.s32.totalorder %s17, 0
      %p38 = por %p36, %p37
      %p39 = scmp.ne.s32.totalorder %s25, %s26
      %p40 = scmp.eq.s32.totalorder %s18, 1
      %p41 = por %p39, %p40
      %p43 = scmp.ne.s32.totalorder %s26, %s42
      %p44 = scmp.eq.s32.totalorder %s18, 0
      %p45 = por %p43, %p44
      %s47 = sadd.s32 %s46, 1
      %p50 = scmp.eq.s32.totalorder %s12, 1
      %p51 = scmp.ne.s32.totalorder %s46, %s48
      %p52 = scmp.eq.s32.totalorder %s12, 0
      %p53 = por %p51, %p52
      %p54 = scmp.ne.s32.totalorder %s46, %s48
      %p55 = scmp.eq.s32.totalorder %s17, 1
      %p56 = por %p54, %p55
      %p57 = scmp.ne.s32.totalorder %s48, %s49
      %p58 = scmp.eq.s32.totalorder %s17, 0
      %p59 = por %p57, %p58
      %p60 = scmp.ne.s32.totalorder %s48, %s49
      %p61 = scmp.eq.s32.totalorder %s18, 1
      %p62 = por %p60, %p61
      %p64 = scmp.ne.s32.totalorder %s49, %s63
      %p65 = scmp.eq.s32.totalorder %s18, 0
      %p66 = por %p64, %p65
      %s68 = sadd.s32 %s67, 1
      %p71 = scmp.eq.s32.totalorder %s12, 1
      %p72 = scmp.ne.s32.totalorder %s67, %s69
      %p73 = scmp.eq.s32.totalorder %s12, 0
      %p74 = por %p72, %p73
      %p75 = scmp.ne.s32.totalorder %s67, %s69
      %p76 = scmp.eq.s32.totalorder %s17, 1
      %p77 = por %p75, %p76
      %p78 = scmp.ne.s32.totalorder %s69, %s70
      %p79 = scmp.eq.s32.totalorder %s17, 0
      %p80 = por %p78, %p79
      %p81 = scmp.ne.s32.totalorder %s69, %s70
      %p82 = scmp.eq.s32.totalorder %s18, 1
      %p83 = por %p81, %p82
      %p85 = scmp.ne.s32.totalorder %s70, %s84
      %p86 = scmp.eq.s32.totalorder %s18, 0
      %p87 = por %p85, %p86
      %s88 = ssub.s32 %s12, %s19
      %p89 = scmp.eq.s32.totalorder %s88, 0
      %s91 = sadd.s32 %s90, 1
      %s92 = scalar_select %p89, %s90, %s91
      %p95 = pneg %p89
      %p96 = scmp.eq.s32.totalorder %s12, 1
      %p97 = por %p95, %p96
      %p98 = scmp.ne.s32.totalorder %s90, %s93
      %p99 = scmp.eq.s32.totalorder %s12, 0
      %p100 = por %p98, %p99
      %p101 = scmp.ne.s32.totalorder %s90, %s93
      %p102 = scmp.eq.s32.totalorder %s17, 1
      %p103 = por %p101, %p102
      %p104 = scmp.ne.s32.totalorder %s93, %s94
      %p105 = scmp.eq.s32.totalorder %s17, 0
      %p106 = por %p104, %p105
      %p107 = scmp.ne.s32.totalorder %s93, %s94
      %p108 = scmp.eq.s32.totalorder %s18, 1
      %p109 = por %p107, %p108
      %p111 = scmp.ne.s32.totalorder %s94, %s110
      %p112 = scmp.eq.s32.totalorder %s18, 0
      %p113 = por %p111, %p112
      %p114 = scmp.le.s32.totalorder 1, %s12
      %p115 = scmp.lt.s32.totalorder %s12, 3
      %p116 = pnand %p114, %p115
      %p117 = pneg %p116
      // Predicated region
      $region9: #{tpu_custom_call.1} parent=5 // pred_check
        _
      $region10: #{tpu_custom_call.1} parent=5 // pred_check_branch
        %119 = sbr.rel (%p116) target = $region12
      $region11: #{tpu_custom_call.1} parent=5 // pred_region
        %s120 = ssub.s32 %s12, 1
        // Predicated region
        $region13: #{tpu_custom_call.1} parent=11 // pred_check
          %p121 = pneg %p59
        $region14: #{tpu_custom_call.1} parent=11 // pred_check_branch
          %123 = sbr.rel (%p121) target = $region16
        $region15: #{tpu_custom_call.1} parent=11 // pred_region
          _
        $region16: #{tpu_custom_call.1} parent=11 // pred_fallthru
          _
        // Predicated region
        $region17: #{tpu_custom_call.1} parent=11 // pred_check
          %p124 = pneg %p80
        $region18: #{tpu_custom_call.1} parent=11 // pred_check_branch
          %126 = sbr.rel (%p124) target = $region20
        $region19: #{tpu_custom_call.1} parent=11 // pred_region
          _
        $region20: #{tpu_custom_call.1} parent=11 // pred_fallthru
          _
      $region12: #{tpu_custom_call.1} parent=5 // pred_fallthru
        _
      %p127 = scmp.lt.s32.totalorder %s12, 2
      // Predicated region
      $region21: #{tpu_custom_call.1} parent=5 // pred_check
        %p128 = pneg %p127
      $region22: #{tpu_custom_call.1} parent=5 // pred_check_branch
        %130 = sbr.rel (%p128) target = $region24
      $region23: #{tpu_custom_call.1} parent=5 // pred_region
        // Predicated region
        $region25: #{tpu_custom_call.1} parent=23 // pred_check
          %p131 = pneg %p32
        $region26: #{tpu_custom_call.1} parent=23 // pred_check_branch
          %133 = sbr.rel (%p131) target = $region28
        $region27: #{tpu_custom_call.1} parent=23 // pred_region
          %p134 = scmp.lt.s32.totalorder %s12, 1
          %s135 = scalar_select %p134, %s12, 1
          %s136 = smul.addr %s135, 7
          %s137 = smul.addr %s136, 8
          %s138 = scalar_lea.vmem %s0, %s137
        $region28: #{tpu_custom_call.1} parent=23 // pred_fallthru
          _
      $region24: #{tpu_custom_call.1} parent=5 // pred_fallthru
        _
      %p139 = scmp.le.s32.totalorder 1, %s12
      %p140 = scmp.lt.s32.totalorder %s12, 3
      %p141 = pnand %p139, %p140
      %p142 = pneg %p141
      // Predicated region
      $region29: #{tpu_custom_call.1} parent=5 // pred_check
        _
      $region30: #{tpu_custom_call.1} parent=5 // pred_check_branch
        %144 = sbr.rel (%p141) target = $region32
      $region31: #{tpu_custom_call.1} parent=5 // pred_region
        %s145 = ssub.s32 %s12, 1
        %p146 = scmp.lt.s32.totalorder %s17, 1
        %s147 = scalar_select %p146, %s17, 1
        %s148 = smul.addr %s147, 7
        %s149 = smul.addr %s148, 8
        %s150 = scalar_lea.vmem %s0, %s149
        %p151 = pneg %p38
        %p152 = pneg %p35
        %p153 = pneg %p59
        %p154 = pneg %p56
        %p155 = pneg %p80
        %p156 = pneg %p77
        %p157 = pneg %p106
        %p158 = pneg %p103
        %s159 = sand.u32 %s93, 1
        %s160 = scalar_lea.sflag [#allocation4], %s159
        %s161 = sand.u32 %s93, 1
        %s162 = smul.addr %s161, 2
        %s163 = scalar_lea.vmem [#allocation3], %s162
        %p164 = scmp.lt.s32.totalorder %s17, 1
        %s165 = scalar_select %p164, %s17, 1
        %s166 = smul.addr %s165, 7
        %s167 = smul.addr %s166, 8
        %s168 = scalar_lea.vmem %s0, %s167
        %v170 = vld [vmem:[%s168] sm:$0xff]
        %v171 = vld [vmem:[%s168 + $0x8] sm:$0xff]
        %v172 = vld [vmem:[%s168 + $0x10] sm:$0xff]
        %v173 = vld [vmem:[%s168 + $0x18] sm:$0xff]
        %v174 = vld [vmem:[%s168 + $0x20] sm:$0xff]
        %v175 = vld [vmem:[%s168 + $0x28] sm:$0xff]
        %v176 = vld [vmem:[%s168 + $0x30] sm:$0x7]
        %v177 = vpack.c.bf16 %v171, %v170
        %v178 = vpack.c.bf16 %v173, %v172
        %v179 = vld [vmem:[%s1] sm:$0x3]
        %s180 = scalar_lea.vmem %s1, 2
        %v181 = vld [vmem:[%s180] sm:$0x3]
        %vm182 = vsmask.f32 7424
        %v184 = vshrl.u32 %v177, 16
        %v186 = vshll.u32 %v177, 16
        %v188 = vrot.slane %v186, 1
        %v189 = vor.u32 %v184, %v188
        %v191 = vshll.u32 %v178, 16
        %v193 = vrot.slane %v191, 1
        %v194 = vsel %vm182, %v189, %v193
        %v195 = vshrl.u32 %v178, 16
        %v197 = vor.u32 %v195, %v193
        %vm198 = vcmask 31744
        %v200 = vsel %vm198, %v194, 0
        %v203 = vsel %vm198, %v197, 0
        %vm205 = vcmask 1041408
        %v207 = vsel %vm205, %v181, 0
        %209 = vmatprep.subr.bf16.mxu0 0
        %210 = vmatpush1.bf16.msra.mxu0 %v207
        %211 = vmatprep.subr.bf16.mxu0 0
        %212 = vmatpush1.bf16.msra.mxu0 0
        %213 = vmatprep.subr.bf16.mxu0 0
        %214 = vmatpush1.bf16.msra.mxu0 0
        %215 = vmatprep.subr.bf16.mxu0 0
        %216 = vmatpush1.bf16.msra.mxu0 0
        %217 = vmatprep.subr.bf16.mxu0 0
        %218 = vmatpush1.bf16.msra.mxu0 0
        %219 = vmatprep.subr.bf16.mxu0 0
        %220 = vmatpush1.bf16.msra.mxu0 0
        %221 = vmatprep.subr.bf16.mxu0 0
        %222 = vmatpush1.bf16.msra.mxu0 0
        %223 = vmatprep.subr.bf16.mxu0 0
        %224 = vmatpush1.bf16.msra.mxu0 0
        %225 = vmatprep.subr.bf16.mxu0 0
        %226 = vmatpush1.bf16.msra.mxu0 0
        %227 = vmatprep.subr.bf16.mxu0 0
        %228 = vmatpush1.bf16.msra.mxu0 0
        %229 = vmatprep.subr.bf16.mxu0 0
        %230 = vmatpush1.bf16.msra.mxu0 0
        %231 = vmatprep.subr.bf16.mxu0 0
        %232 = vmatpush1.bf16.msra.mxu0 0
        %233 = vmatprep.subr.bf16.mxu0 0
        %234 = vmatpush1.bf16.msra.mxu0 0
        %235 = vmatprep.subr.bf16.mxu0 0
        %236 = vmatpush1.bf16.msra.mxu0 0
        %237 = vmatprep.subr.bf16.mxu0 0
        %238 = vmatpush1.bf16.msra.mxu0 0
        %239 = vmatprep.subr.bf16.mxu0 0
        %240 = vmatpush1.bf16.msra.mxu0 0
        %241 = vmatprep.mubr.bf16.mxu0 0
        %242 = vmatmul.mubr.bf16.gmra.mrb[0].mxu0 %v200
        %v243 = vpop.f32.mrb[0].mxu0
        %v244 = vadd.f32 0.0, %v243
        %v245 = vpop.f32.mrb[0].mxu0
        %v246 = vpop.f32.mrb[0].mxu0
        %v247 = vadd.f32 0.0, %v246
        %v248 = vpop.f32.mrb[0].mxu0
        %249 = vmatprep.mubr.bf16.mxu0 0
        %250 = vmatmul.mubr.bf16.gmra.mrb[0].mxu0 %v203
        %v251 = vpop.f32.mrb[0].mxu0
        %v252 = vadd.f32 0.0, %v251
        %v253 = vpop.f32.mrb[0].mxu0
        %v254 = vpop.f32.mrb[0].mxu0
        %v255 = vadd.f32 0.0, %v254
        %v256 = vpop.f32.mrb[0].mxu0
        %257 = vdwg.mxu0
        %v258 = vsel %vm198, %v177, 0
        %v260 = vsel %vm198, %v178, 0
        %v263 = vsel %vm205, %v179, 0
        %265 = vmatprep.subr.bf16.mxu0 0
        %266 = vmatpush1.bf16.msra.mxu0 %v263
        %267 = vmatprep.subr.bf16.mxu0 0
        %268 = vmatpush1.bf16.msra.mxu0 0
        %269 = vmatprep.subr.bf16.mxu0 0
        %270 = vmatpush1.bf16.msra.mxu0 0
        %271 = vmatprep.subr.bf16.mxu0 0
        %272 = vmatpush1.bf16.msra.mxu0 0
        %273 = vmatprep.subr.bf16.mxu0 0
        %274 = vmatpush1.bf16.msra.mxu0 0
        %275 = vmatprep.subr.bf16.mxu0 0
        %276 = vmatpush1.bf16.msra.mxu0 0
        %277 = vmatprep.subr.bf16.mxu0 0
        %278 = vmatpush1.bf16.msra.mxu0 0
        %279 = vmatprep.subr.bf16.mxu0 0
        %280 = vmatpush1.bf16.msra.mxu0 0
        %281 = vmatprep.subr.bf16.mxu0 0
        %282 = vmatpush1.bf16.msra.mxu0 0
        %283 = vmatprep.subr.bf16.mxu0 0
        %284 = vmatpush1.bf16.msra.mxu0 0
        %285 = vmatprep.subr.bf16.mxu0 0
        %286 = vmatpush1.bf16.msra.mxu0 0
        %287 = vmatprep.subr.bf16.mxu0 0
        %288 = vmatpush1.bf16.msra.mxu0 0
        %289 = vmatprep.subr.bf16.mxu0 0
        %290 = vmatpush1.bf16.msra.mxu0 0
        %291 = vmatprep.subr.bf16.mxu0 0
        %292 = vmatpush1.bf16.msra.mxu0 0
        %293 = vmatprep.subr.bf16.mxu0 0
        %294 = vmatpush1.bf16.msra.mxu0 0
        %295 = vmatprep.subr.bf16.mxu0 0
        %296 = vmatpush1.bf16.msra.mxu0 0
        %297 = vmatprep.mubr.bf16.mxu0 0
        %298 = vmatmul.mubr.bf16.gmra.mrb[0].mxu0 %v258
        %v299 = vpop.f32.mrb[0].mxu0
        %v300 = vadd.f32 %v244, %v299
        %v301 = vpop.f32.mrb[0].mxu0
        %v302 = vpop.f32.mrb[0].mxu0
        %v303 = vadd.f32 %v247, %v302
        %v304 = vpop.f32.mrb[0].mxu0
        %305 = vmatprep.mubr.bf16.mxu0 0
        %306 = vmatmul.mubr.bf16.gmra.mrb[0].mxu0 %v260
        %v307 = vpop.f32.mrb[0].mxu0
        %v308 = vadd.f32 %v252, %v307
        %v309 = vpop.f32.mrb[0].mxu0
        %v310 = vpop.f32.mrb[0].mxu0
        %v311 = vadd.f32 %v255, %v310
        %v312 = vpop.f32.mrb[0].mxu0
        %313 = vdwg.mxu0
        %s314 = scalar_lea.vmem %s1, 4
        %v315 = vld [vmem:[%s314] sm:$0x3]
        %vm318 = vcmask 1046528
        %v319 = vrot.slane %v177, 1
        %v320 = vrot.slane %v178, 1
        %v321 = vsel %vm318, %v319, %v320
        %v323 = vsel %vm198, %v321, 0
        %v326 = vsel %vm198, %v320, 0
        %v329 = vsel %vm205, %v315, 0
        %331 = vmatprep.subr.bf16.mxu0 0
        %332 = vmatpush1.bf16.msra.mxu0 %v329
        %333 = vmatprep.subr.bf16.mxu0 0
        %334 = vmatpush1.bf16.msra.mxu0 0
        %335 = vmatprep.subr.bf16.mxu0 0
        %336 = vmatpush1.bf16.msra.mxu0 0
        %337 = vmatprep.subr.bf16.mxu0 0
        %338 = vmatpush1.bf16.msra.mxu0 0
        %339 = vmatprep.subr.bf16.mxu0 0
        %340 = vmatpush1.bf16.msra.mxu0 0
        %341 = vmatprep.subr.bf16.mxu0 0
        %342 = vmatpush1.bf16.msra.mxu0 0
        %343 = vmatprep.subr.bf16.mxu0 0
        %344 = vmatpush1.bf16.msra.mxu0 0
        %345 = vmatprep.subr.bf16.mxu0 0
        %346 = vmatpush1.bf16.msra.mxu0 0
        %347 = vmatprep.subr.bf16.mxu0 0
        %348 = vmatpush1.bf16.msra.mxu0 0
        %349 = vmatprep.subr.bf16.mxu0 0
        %350 = vmatpush1.bf16.msra.mxu0 0
        %351 = vmatprep.subr.bf16.mxu0 0
        %352 = vmatpush1.bf16.msra.mxu0 0
        %353 = vmatprep.subr.bf16.mxu0 0
        %354 = vmatpush1.bf16.msra.mxu0 0
        %355 = vmatprep.subr.bf16.mxu0 0
        %356 = vmatpush1.bf16.msra.mxu0 0
        %357 = vmatprep.subr.bf16.mxu0 0
        %358 = vmatpush1.bf16.msra.mxu0 0
        %359 = vmatprep.subr.bf16.mxu0 0
        %360 = vmatpush1.bf16.msra.mxu0 0
        %361 = vmatprep.subr.bf16.mxu0 0
        %362 = vmatpush1.bf16.msra.mxu0 0
        %363 = vmatprep.mubr.bf16.mxu0 0
        %364 = vmatmul.mubr.bf16.gmra.mrb[0].mxu0 %v323
        %v365 = vpop.f32.mrb[0].mxu0
        %v366 = vadd.f32 0.0, %v365
        %v367 = vpop.f32.mrb[0].mxu0
        %v368 = vpop.f32.mrb[0].mxu0
        %v369 = vadd.f32 0.0, %v368
        %v370 = vpop.f32.mrb[0].mxu0
        %371 = vmatprep.mubr.bf16.mxu0 0
        %372 = vmatmul.mubr.bf16.gmra.mrb[0].mxu0 %v326
        %v373 = vpop.f32.mrb[0].mxu0
        %v374 = vadd.f32 0.0, %v373
        %v375 = vpop.f32.mrb[0].mxu0
        %v376 = vpop.f32.mrb[0].mxu0
        %v377 = vadd.f32 0.0, %v376
        %v378 = vpop.f32.mrb[0].mxu0
        %379 = vdwg.mxu0
        %v380 = vadd.f32 %v300, %v366
        %v381 = vadd.f32 %v303, %v369
        %v382 = vadd.f32 %v308, %v374
        %v383 = vadd.f32 %v311, %v377
        %s384 = scalar_lea.vmem %s1, 6
        %v385 = vld [vmem:[%s384] sm:$0x3]
        %vm386 = vsmask.f32 6400
        %v387 = vrot.slane %v184, 1
        %v388 = vrot.slane %v186, 2
        %v389 = vor.u32 %v387, %v388
        %v390 = vrot.slane %v195, 1
        %v391 = vrot.slane %v191, 2
        %v392 = vor.u32 %v390, %v391
        %v393 = vsel %vm386, %v389, %v392
        %v395 = vsel %vm198, %v393, 0
        %v398 = vsel %vm198, %v392, 0
        %v401 = vsel %vm205, %v385, 0
        %403 = vmatprep.subr.bf16.mxu0 0
        %404 = vmatpush1.bf16.msra.mxu0 %v401
        %405 = vmatprep.subr.bf16.mxu0 0
        %406 = vmatpush1.bf16.msra.mxu0 0
        %407 = vmatprep.subr.bf16.mxu0 0
        %408 = vmatpush1.bf16.msra.mxu0 0
        %409 = vmatprep.subr.bf16.mxu0 0
        %410 = vmatpush1.bf16.msra.mxu0 0
        %411 = vmatprep.subr.bf16.mxu0 0
        %412 = vmatpush1.bf16.msra.mxu0 0
        %413 = vmatprep.subr.bf16.mxu0 0
        %414 = vmatpush1.bf16.msra.mxu0 0
        %415 = vmatprep.subr.bf16.mxu0 0
        %416 = vmatpush1.bf16.msra.mxu0 0
        %417 = vmatprep.subr.bf16.mxu0 0
        %418 = vmatpush1.bf16.msra.mxu0 0
        %419 = vmatprep.subr.bf16.mxu0 0
        %420 = vmatpush1.bf16.msra.mxu0 0
        %421 = vmatprep.subr.bf16.mxu0 0
        %422 = vmatpush1.bf16.msra.mxu0 0
        %423 = vmatprep.subr.bf16.mxu0 0
        %424 = vmatpush1.bf16.msra.mxu0 0
        %425 = vmatprep.subr.bf16.mxu0 0
        %426 = vmatpush1.bf16.msra.mxu0 0
        %427 = vmatprep.subr.bf16.mxu0 0
        %428 = vmatpush1.bf16.msra.mxu0 0
        %429 = vmatprep.subr.bf16.mxu0 0
        %430 = vmatpush1.bf16.msra.mxu0 0
        %431 = vmatprep.subr.bf16.mxu0 0
        %432 = vmatpush1.bf16.msra.mxu0 0
        %433 = vmatprep.subr.bf16.mxu0 0
        %434 = vmatpush1.bf16.msra.mxu0 0
        %435 = vmatprep.mubr.bf16.mxu0 0
        %436 = vmatmul.mubr.bf16.gmra.mrb[0].mxu0 %v395
        %v437 = vpop.f32.mrb[0].mxu0
        %v438 = vadd.f32 0.0, %v437
        %v439 = vpop.f32.mrb[0].mxu0
        %v440 = vpop.f32.mrb[0].mxu0
        %v441 = vadd.f32 0.0, %v440
        %v442 = vpop.f32.mrb[0].mxu0
        %443 = vmatprep.mubr.bf16.mxu0 0
        %444 = vmatmul.mubr.bf16.gmra.mrb[0].mxu0 %v398
        %v445 = vpop.f32.mrb[0].mxu0
        %v446 = vadd.f32 0.0, %v445
        %v447 = vpop.f32.mrb[0].mxu0
        %v448 = vpop.f32.mrb[0].mxu0
        %v449 = vadd.f32 0.0, %v448
        %v450 = vpop.f32.mrb[0].mxu0
        %451 = vdwg.mxu0
        %v452 = vadd.f32 %v380, %v438
        %v453 = vadd.f32 %v381, %v441
        %v454 = vadd.f32 %v382, %v446
        %v455 = vadd.f32 %v383, %v449
        %s456 = scalar_lea.vmem %s1, 8
        %v457 = vld [vmem:[%s456] sm:$0x3]
        %vm458 = vcmask 1045504
        %v459 = vrot.slane %v177, 2
        %v460 = vrot.slane %v178, 2
        %v461 = vsel %vm458, %v459, %v460
        %v463 = vsel %vm198, %v461, 0
        %v466 = vsel %vm198, %v460, 0
        %v469 = vsel %vm205, %v457, 0
        %471 = vmatprep.subr.bf16.mxu0 0
        %472 = vmatpush1.bf16.msra.mxu0 %v469
        %473 = vmatprep.subr.bf16.mxu0 0
        %474 = vmatpush1.bf16.msra.mxu0 0
        %475 = vmatprep.subr.bf16.mxu0 0
        %476 = vmatpush1.bf16.msra.mxu0 0
        %477 = vmatprep.subr.bf16.mxu0 0
        %478 = vmatpush1.bf16.msra.mxu0 0
        %479 = vmatprep.subr.bf16.mxu0 0
        %480 = vmatpush1.bf16.msra.mxu0 0
        %481 = vmatprep.subr.bf16.mxu0 0
        %482 = vmatpush1.bf16.msra.mxu0 0
        %483 = vmatprep.subr.bf16.mxu0 0
        %484 = vmatpush1.bf16.msra.mxu0 0
        %485 = vmatprep.subr.bf16.mxu0 0
        %486 = vmatpush1.bf16.msra.mxu0 0
        %487 = vmatprep.subr.bf16.mxu0 0
        %488 = vmatpush1.bf16.msra.mxu0 0
        %489 = vmatprep.subr.bf16.mxu0 0
        %490 = vmatpush1.bf16.msra.mxu0 0
        %491 = vmatprep.subr.bf16.mxu0 0
        %492 = vmatpush1.bf16.msra.mxu0 0
        %493 = vmatprep.subr.bf16.mxu0 0
        %494 = vmatpush1.bf16.msra.mxu0 0
        %495 = vmatprep.subr.bf16.mxu0 0
        %496 = vmatpush1.bf16.msra.mxu0 0
        %497 = vmatprep.subr.bf16.mxu0 0
        %498 = vmatpush1.bf16.msra.mxu0 0
        %499 = vmatprep.subr.bf16.mxu0 0
        %500 = vmatpush1.bf16.msra.mxu0 0
        %501 = vmatprep.subr.bf16.mxu0 0
        %502 = vmatpush1.bf16.msra.mxu0 0
        %503 = vmatprep.mubr.bf16.mxu0 0
        %504 = vmatmul.mubr.bf16.gmra.mrb[0].mxu0 %v463
        %v505 = vpop.f32.mrb[0].mxu0
        %v506 = vadd.f32 0.0, %v505
        %v507 = vpop.f32.mrb[0].mxu0
        %v508 = vpop.f32.mrb[0].mxu0
        %v509 = vadd.f32 0.0, %v508
        %v510 = vpop.f32.mrb[0].mxu0
        %511 = vmatprep.mubr.bf16.mxu0 0
        %512 = vmatmul.mubr.bf16.gmra.mrb[0].mxu0 %v466
        %v513 = vpop.f32.mrb[0].mxu0
        %v514 = vadd.f32 0.0, %v513
        %v515 = vpop.f32.mrb[0].mxu0
        %v516 = vpop.f32.mrb[0].mxu0
        %v517 = vadd.f32 0.0, %v516
        %v518 = vpop.f32.mrb[0].mxu0
        %519 = vdwg.mxu0
        %v520 = vadd.f32 %v452, %v506
        %v521 = vadd.f32 %v453, %v509
        %v522 = vadd.f32 %v454, %v514
        %v523 = vadd.f32 %v455, %v517
        %s524 = scalar_lea.vmem %s1, 10
        %v525 = vld [vmem:[%s524] sm:$0x3]
        %vm526 = vsmask.f32 5376
        %v527 = vrot.slane %v184, 2
        %v528 = vrot.slane %v186, 3
        %v529 = vor.u32 %v527, %v528
        %v530 = vrot.slane %v195, 2
        %v531 = vrot.slane %v191, 3
        %v532 = vor.u32 %v530, %v531
        %v533 = vsel %vm526, %v529, %v532
        %v535 = vsel %vm198, %v533, 0
        %v538 = vsel %vm198, %v532, 0
        %v541 = vsel %vm205, %v525, 0
        %543 = vmatprep.subr.bf16.mxu0 0
        %544 = vmatpush1.bf16.msra.mxu0 %v541
        %545 = vmatprep.subr.bf16.mxu0 0
        %546 = vmatpush1.bf16.msra.mxu0 0
        %547 = vmatprep.subr.bf16.mxu0 0
        %548 = vmatpush1.bf16.msra.mxu0 0
        %549 = vmatprep.subr.bf16.mxu0 0
        %550 = vmatpush1.bf16.msra.mxu0 0
        %551 = vmatprep.subr.bf16.mxu0 0
        %552 = vmatpush1.bf16.msra.mxu0 0
        %553 = vmatprep.subr.bf16.mxu0 0
        %554 = vmatpush1.bf16.msra.mxu0 0
        %555 = vmatprep.subr.bf16.mxu0 0
        %556 = vmatpush1.bf16.msra.mxu0 0
        %557 = vmatprep.subr.bf16.mxu0 0
        %558 = vmatpush1.bf16.msra.mxu0 0
        %559 = vmatprep.subr.bf16.mxu0 0
        %560 = vmatpush1.bf16.msra.mxu0 0
        %561 = vmatprep.subr.bf16.mxu0 0
        %562 = vmatpush1.bf16.msra.mxu0 0
        %563 = vmatprep.subr.bf16.mxu0 0
        %564 = vmatpush1.bf16.msra.mxu0 0
        %565 = vmatprep.subr.bf16.mxu0 0
        %566 = vmatpush1.bf16.msra.mxu0 0
        %567 = vmatprep.subr.bf16.mxu0 0
        %568 = vmatpush1.bf16.msra.mxu0 0
        %569 = vmatprep.subr.bf16.mxu0 0
        %570 = vmatpush1.bf16.msra.mxu0 0
        %571 = vmatprep.subr.bf16.mxu0 0
        %572 = vmatpush1.bf16.msra.mxu0 0
        %573 = vmatprep.subr.bf16.mxu0 0
        %574 = vmatpush1.bf16.msra.mxu0 0
        %575 = vmatprep.mubr.bf16.mxu0 0
        %576 = vmatmul.mubr.bf16.gmra.mrb[0].mxu0 %v535
        %v577 = vpop.f32.mrb[0].mxu0
        %v578 = vadd.f32 0.0, %v577
        %v579 = vpop.f32.mrb[0].mxu0
        %v580 = vpop.f32.mrb[0].mxu0
        %v581 = vadd.f32 0.0, %v580
        %v582 = vpop.f32.mrb[0].mxu0
        %583 = vmatprep.mubr.bf16.mxu0 0
        %584 = vmatmul.mubr.bf16.gmra.mrb[0].mxu0 %v538
        %v585 = vpop.f32.mrb[0].mxu0
        %v586 = vadd.f32 0.0, %v585
        %v587 = vpop.f32.mrb[0].mxu0
        %v588 = vpop.f32.mrb[0].mxu0
        %v589 = vadd.f32 0.0, %v588
        %v590 = vpop.f32.mrb[0].mxu0
        %591 = vdwg.mxu0
        %v592 = vadd.f32 %v520, %v578
        %v593 = vadd.f32 %v521, %v581
        %v594 = vadd.f32 %v522, %v586
        %v595 = vadd.f32 %v523, %v589
        %s596 = scalar_lea.vmem %s1, 12
        %v597 = vld [vmem:[%s596] sm:$0x3]
        %vm598 = vcmask 1044480
        %v599 = vrot.slane %v177, 3
        %v600 = vrot.slane %v178, 3
        %v601 = vsel %vm598, %v599, %v600
        %v603 = vsel %vm198, %v601, 0
        %v606 = vsel %vm198, %v600, 0
        %v609 = vsel %vm205, %v597, 0
        %611 = vmatprep.subr.bf16.mxu0 0
        %612 = vmatpush1.bf16.msra.mxu0 %v609
        %613 = vmatprep.subr.bf16.mxu0 0
        %614 = vmatpush1.bf16.msra.mxu0 0
        %615 = vmatprep.subr.bf16.mxu0 0
        %616 = vmatpush1.bf16.msra.mxu0 0
        %617 = vmatprep.subr.bf16.mxu0 0
        %618 = vmatpush1.bf16.msra.mxu0 0
        %619 = vmatprep.subr.bf16.mxu0 0
        %620 = vmatpush1.bf16.msra.mxu0 0
        %621 = vmatprep.subr.bf16.mxu0 0
        %622 = vmatpush1.bf16.msra.mxu0 0
        %623 = vmatprep.subr.bf16.mxu0 0
        %624 = vmatpush1.bf16.msra.mxu0 0
        %625 = vmatprep.subr.bf16.mxu0 0
        %626 = vmatpush1.bf16.msra.mxu0 0
        %627 = vmatprep.subr.bf16.mxu0 0
        %628 = vmatpush1.bf16.msra.mxu0 0
        %629 = vmatprep.subr.bf16.mxu0 0
        %630 = vmatpush1.bf16.msra.mxu0 0
        %631 = vmatprep.subr.bf16.mxu0 0
        %632 = vmatpush1.bf16.msra.mxu0 0
        %633 = vmatprep.subr.bf16.mxu0 0
        %634 = vmatpush1.bf16.msra.mxu0 0
        %635 = vmatprep.subr.bf16.mxu0 0
        %636 = vmatpush1.bf16.msra.mxu0 0
        %637 = vmatprep.subr.bf16.mxu0 0
        %638 = vmatpush1.bf16.msra.mxu0 0
        %639 = vmatprep.subr.bf16.mxu0 0
        %640 = vmatpush1.bf16.msra.mxu0 0
        %641 = vmatprep.subr.bf16.mxu0 0
        %642 = vmatpush1.bf16.msra.mxu0 0
        %643 = vmatprep.mubr.bf16.mxu0 0
        %644 = vmatmul.mubr.bf16.gmra.mrb[0].mxu0 %v603
        %v645 = vpop.f32.mrb[0].mxu0
        %v646 = vadd.f32 0.0, %v645
        %v647 = vpop.f32.mrb[0].mxu0
        %v648 = vpop.f32.mrb[0].mxu0
        %v649 = vadd.f32 0.0, %v648
        %v650 = vpop.f32.mrb[0].mxu0
        %651 = vmatprep.mubr.bf16.mxu0 0
        %652 = vmatmul.mubr.bf16.gmra.mrb[0].mxu0 %v606
        %v653 = vpop.f32.mrb[0].mxu0
        %v654 = vadd.f32 0.0, %v653
        %v655 = vpop.f32.mrb[0].mxu0
        %v656 = vpop.f32.mrb[0].mxu0
        %v657 = vadd.f32 0.0, %v656
        %v658 = vpop.f32.mrb[0].mxu0
        %659 = vdwg.mxu0
        %v660 = vadd.f32 %v592, %v646
        %v661 = vadd.f32 %v593, %v649
        %v662 = vadd.f32 %v594, %v654
        %v663 = vadd.f32 %v595, %v657
        %v664 = vpack.c.bf16 %v174, %v174
        %s665 = scalar_lea.vmem %s1, 14
        %v666 = vld [vmem:[%s665] sm:$0x3]
        %vm667 = vsmask.f32 4352
        %v668 = vrot.slane %v184, 3
        %v669 = vrot.slane %v186, 4
        %v670 = vor.u32 %v668, %v669
        %v671 = vrot.slane %v195, 3
        %v672 = vrot.slane %v191, 4
        %v673 = vor.u32 %v671, %v672
        %v674 = vsel %vm667, %v670, %v673
        %v676 = vshll.u32 %v664, 16
        %v678 = vrot.slane %v676, 4
        %v679 = vsel %vm667, %v673, %v678
        %v681 = vsel %vm198, %v674, 0
        %v684 = vsel %vm198, %v679, 0
        %v687 = vsel %vm205, %v666, 0
        %689 = vmatprep.subr.bf16.mxu0 0
        %690 = vmatpush1.bf16.msra.mxu0 %v687
        %691 = vmatprep.subr.bf16.mxu0 0
        %692 = vmatpush1.bf16.msra.mxu0 0
        %693 = vmatprep.subr.bf16.mxu0 0
        %694 = vmatpush1.bf16.msra.mxu0 0
        %695 = vmatprep.subr.bf16.mxu0 0
        %696 = vmatpush1.bf16.msra.mxu0 0
        %697 = vmatprep.subr.bf16.mxu0 0
        %698 = vmatpush1.bf16.msra.mxu0 0
        %699 = vmatprep.subr.bf16.mxu0 0
        %700 = vmatpush1.bf16.msra.mxu0 0
        %701 = vmatprep.subr.bf16.mxu0 0
        %702 = vmatpush1.bf16.msra.mxu0 0
        %703 = vmatprep.subr.bf16.mxu0 0
        %704 = vmatpush1.bf16.msra.mxu0 0
        %705 = vmatprep.subr.bf16.mxu0 0
        %706 = vmatpush1.bf16.msra.mxu0 0
        %707 = vmatprep.subr.bf16.mxu0 0
        %708 = vmatpush1.bf16.msra.mxu0 0
        %709 = vmatprep.subr.bf16.mxu0 0
        %710 = vmatpush1.bf16.msra.mxu0 0
        %711 = vmatprep.subr.bf16.mxu0 0
        %712 = vmatpush1.bf16.msra.mxu0 0
        %713 = vmatprep.subr.bf16.mxu0 0
        %714 = vmatpush1.bf16.msra.mxu0 0
        %715 = vmatprep.subr.bf16.mxu0 0
        %716 = vmatpush1.bf16.msra.mxu0 0
        %717 = vmatprep.subr.bf16.mxu0 0
        %718 = vmatpush1.bf16.msra.mxu0 0
        %719 = vmatprep.subr.bf16.mxu0 0
        %720 = vmatpush1.bf16.msra.mxu0 0
        %721 = vmatprep.mubr.bf16.mxu0 0
        %722 = vmatmul.mubr.bf16.gmra.mrb[0].mxu0 %v681
        %v723 = vpop.f32.mrb[0].mxu0
        %v724 = vadd.f32 0.0, %v723
        %v725 = vpop.f32.mrb[0].mxu0
        %v726 = vpop.f32.mrb[0].mxu0
        %v727 = vadd.f32 0.0, %v726
        %v728 = vpop.f32.mrb[0].mxu0
        %729 = vmatprep.mubr.bf16.mxu0 0
        %730 = vmatmul.mubr.bf16.gmra.mrb[0].mxu0 %v684
        %v731 = vpop.f32.mrb[0].mxu0
        %v732 = vadd.f32 0.0, %v731
        %v733 = vpop.f32.mrb[0].mxu0
        %v734 = vpop.f32.mrb[0].mxu0
        %v735 = vadd.f32 0.0, %v734
        %v736 = vpop.f32.mrb[0].mxu0
        %737 = vdwg.mxu0
        %v738 = vadd.f32 %v660, %v724
        %v739 = vadd.f32 %v661, %v727
        %v740 = vadd.f32 %v662, %v732
        %v741 = vadd.f32 %v663, %v735
        %v742 = vpack.c.bf16 %v172, %v171
        %v743 = vpack.c.bf16 %v174, %v173
        %s744 = scalar_lea.vmem %s1, 16
        %v745 = vld [vmem:[%s744] sm:$0x3]
        %v747 = vsel %vm198, %v742, 0
        %v750 = vsel %vm198, %v743, 0
        %v753 = vsel %vm205, %v745, 0
        %755 = vmatprep.subr.bf16.mxu0 0
        %756 = vmatpush1.bf16.msra.mxu0 %v753
        %757 = vmatprep.subr.bf16.mxu0 0
        %758 = vmatpush1.bf16.msra.mxu0 0
        %759 = vmatprep.subr.bf16.mxu0 0
        %760 = vmatpush1.bf16.msra.mxu0 0
        %761 = vmatprep.subr.bf16.mxu0 0
        %762 = vmatpush1.bf16.msra.mxu0 0
        %763 = vmatprep.subr.bf16.mxu0 0
        %764 = vmatpush1.bf16.msra.mxu0 0
        %765 = vmatprep.subr.bf16.mxu0 0
        %766 = vmatpush1.bf16.msra.mxu0 0
        %767 = vmatprep.subr.bf16.mxu0 0
        %768 = vmatpush1.bf16.msra.mxu0 0
        %769 = vmatprep.subr.bf16.mxu0 0
        %770 = vmatpush1.bf16.msra.mxu0 0
        %771 = vmatprep.subr.bf16.mxu0 0
        %772 = vmatpush1.bf16.msra.mxu0 0
        %773 = vmatprep.subr.bf16.mxu0 0
        %774 = vmatpush1.bf16.msra.mxu0 0
        %775 = vmatprep.subr.bf16.mxu0 0
        %776 = vmatpush1.bf16.msra.mxu0 0
        %777 = vmatprep.subr.bf16.mxu0 0
        %778 = vmatpush1.bf16.msra.mxu0 0
        %779 = vmatprep.subr.bf16.mxu0 0
        %780 = vmatpush1.bf16.msra.mxu0 0
        %781 = vmatprep.subr.bf16.mxu0 0
        %782 = vmatpush1.bf16.msra.mxu0 0
        %783 = vmatprep.subr.bf16.mxu0 0
        %784 = vmatpush1.bf16.msra.mxu0 0
        %785 = vmatprep.subr.bf16.mxu0 0
        %786 = vmatpush1.bf16.msra.mxu0 0
        %787 = vmatprep.mubr.bf16.mxu0 0
        %788 = vmatmul.mubr.bf16.gmra.mrb[0].mxu0 %v747
        %v789 = vpop.f32.mrb[0].mxu0
        %v790 = vadd.f32 0.0, %v789
        %v791 = vpop.f32.mrb[0].mxu0
        %v792 = vpop.f32.mrb[0].mxu0
        %v793 = vadd.f32 0.0, %v792
        %v794 = vpop.f32.mrb[0].mxu0
        %795 = vmatprep.mubr.bf16.mxu0 0
        %796 = vmatmul.mubr.bf16.gmra.mrb[0].mxu0 %v750
        %v797 = vpop.f32.mrb[0].mxu0
        %v798 = vadd.f32 0.0, %v797
        %v799 = vpop.f32.mrb[0].mxu0
        %v800 = vpop.f32.mrb[0].mxu0
        %v801 = vadd.f32 0.0, %v800
        %v802 = vpop.f32.mrb[0].mxu0
        %803 = vdwg.mxu0
        %v804 = vadd.f32 %v738, %v790
        %v805 = vadd.f32 %v739, %v793
        %v806 = vadd.f32 %v740, %v798
        %v807 = vadd.f32 %v741, %v801
        %s808 = scalar_lea.vmem %s1, 18
        %v809 = vld [vmem:[%s808] sm:$0x3]
        %v810 = vshrl.u32 %v742, 16
        %v812 = vshll.u32 %v742, 16
        %v814 = vrot.slane %v812, 1
        %v815 = vor.u32 %v810, %v814
        %v816 = vshll.u32 %v743, 16
        %v818 = vrot.slane %v816, 1
        %v819 = vsel %vm182, %v815, %v818
        %v820 = vshrl.u32 %v743, 16
        %v822 = vor.u32 %v820, %v818
        %v824 = vsel %vm198, %v819, 0
        %v827 = vsel %vm198, %v822, 0
        %v830 = vsel %vm205, %v809, 0
        %832 = vmatprep.subr.bf16.mxu0 0
        %833 = vmatpush1.bf16.msra.mxu0 %v830
        %834 = vmatprep.subr.bf16.mxu0 0
        %835 = vmatpush1.bf16.msra.mxu0 0
        %836 = vmatprep.subr.bf16.mxu0 0
        %837 = vmatpush1.bf16.msra.mxu0 0
        %838 = vmatprep.subr.bf16.mxu0 0
        %839 = vmatpush1.bf16.msra.mxu0 0
        %840 = vmatprep.subr.bf16.mxu0 0
        %841 = vmatpush1.bf16.msra.mxu0 0
        %842 = vmatprep.subr.bf16.mxu0 0
        %843 = vmatpush1.bf16.msra.mxu0 0
        %844 = vmatprep.subr.bf16.mxu0 0
        %845 = vmatpush1.bf16.msra.mxu0 0
        %846 = vmatprep.subr.bf16.mxu0 0
        %847 = vmatpush1.bf16.msra.mxu0 0
        %848 = vmatprep.subr.bf16.mxu0 0
        %849 = vmatpush1.bf16.msra.mxu0 0
        %850 = vmatprep.subr.bf16.mxu0 0
        %851 = vmatpush1.bf16.msra.mxu0 0
        %852 = vmatprep.subr.bf16.mxu0 0
        %853 = vmatpush1.bf16.msra.mxu0 0
        %854 = vmatprep.subr.bf16.mxu0 0
        %855 = vmatpush1.bf16.msra.mxu0 0
        %856 = vmatprep.subr.bf16.mxu0 0
        %857 = vmatpush1.bf16.msra.mxu0 0
        %858 = vmatprep.subr.bf16.mxu0 0
        %859 = vmatpush1.bf16.msra.mxu0 0
        %860 = vmatprep.subr.bf16.mxu0 0
        %861 = vmatpush1.bf16.msra.mxu0 0
        %862 = vmatprep.subr.bf16.mxu0 0
        %863 = vmatpush1.bf16.msra.mxu0 0
        %864 = vmatprep.mubr.bf16.mxu0 0
        %865 = vmatmul.mubr.bf16.gmra.mrb[0].mxu0 %v824
        %v866 = vpop.f32.mrb[0].mxu0
        %v867 = vadd.f32 0.0, %v866
        %v868 = vpop.f32.mrb[0].mxu0
        %v869 = vpop.f32.mrb[0].mxu0
        %v870 = vadd.f32 0.0, %v869
        %v871 = vpop.f32.mrb[0].mxu0
        %872 = vmatprep.mubr.bf16.mxu0 0
        %873 = vmatmul.mubr.bf16.gmra.mrb[0].mxu0 %v827
        %v874 = vpop.f32.mrb[0].mxu0
        %v875 = vadd.f32 0.0, %v874
        %v876 = vpop.f32.mrb[0].mxu0
        %v877 = vpop.f32.mrb[0].mxu0
        %v878 = vadd.f32 0.0, %v877
        %v879 = vpop.f32.mrb[0].mxu0
        %880 = vdwg.mxu0
        %v881 = vadd.f32 %v804, %v867
        %v882 = vadd.f32 %v805, %v870
        %v883 = vadd.f32 %v806, %v875
        %v884 = vadd.f32 %v807, %v878
        %s885 = scalar_lea.vmem %s1, 20
        %v886 = vld [vmem:[%s885] sm:$0x3]
        %v889 = vrot.slane %v742, 1
        %v890 = vrot.slane %v743, 1
        %v891 = vsel %vm318, %v889, %v890
        %v893 = vsel %vm198, %v891, 0
        %v896 = vsel %vm198, %v890, 0
        %v899 = vsel %vm205, %v886, 0
        %901 = vmatprep.subr.bf16.mxu0 0
        %902 = vmatpush1.bf16.msra.mxu0 %v899
        %903 = vmatprep.subr.bf16.mxu0 0
        %904 = vmatpush1.bf16.msra.mxu0 0
        %905 = vmatprep.subr.bf16.mxu0 0
        %906 = vmatpush1.bf16.msra.mxu0 0
        %907 = vmatprep.subr.bf16.mxu0 0
        %908 = vmatpush1.bf16.msra.mxu0 0
        %909 = vmatprep.subr.bf16.mxu0 0
        %910 = vmatpush1.bf16.msra.mxu0 0
        %911 = vmatprep.subr.bf16.mxu0 0
        %912 = vmatpush1.bf16.msra.mxu0 0
        %913 = vmatprep.subr.bf16.mxu0 0
        %914 = vmatpush1.bf16.msra.mxu0 0
        %915 = vmatprep.subr.bf16.mxu0 0
        %916 = vmatpush1.bf16.msra.mxu0 0
        %917 = vmatprep.subr.bf16.mxu0 0
        %918 = vmatpush1.bf16.msra.mxu0 0
        %919 = vmatprep.subr.bf16.mxu0 0
        %920 = vmatpush1.bf16.msra.mxu0 0
        %921 = vmatprep.subr.bf16.mxu0 0
        %922 = vmatpush1.bf16.msra.mxu0 0
        %923 = vmatprep.subr.bf16.mxu0 0
        %924 = vmatpush1.bf16.msra.mxu0 0
        %925 = vmatprep.subr.bf16.mxu0 0
        %926 = vmatpush1.bf16.msra.mxu0 0
        %927 = vmatprep.subr.bf16.mxu0 0
        %928 = vmatpush1.bf16.msra.mxu0 0
        %929 = vmatprep.subr.bf16.mxu0 0
        %930 = vmatpush1.bf16.msra.mxu0 0
        %931 = vmatprep.subr.bf16.mxu0 0
        %932 = vmatpush1.bf16.msra.mxu0 0
        %933 = vmatprep.mubr.bf16.mxu0 0
        %934 = vmatmul.mubr.bf16.gmra.mrb[0].mxu0 %v893
        %v935 = vpop.f32.mrb[0].mxu0
        %v936 = vadd.f32 0.0, %v935
        %v937 = vpop.f32.mrb[0].mxu0
        %v938 = vpop.f32.mrb[0].mxu0
        %v939 = vadd.f32 0.0, %v938
        %v940 = vpop.f32.mrb[0].mxu0
        %941 = vmatprep.mubr.bf16.mxu0 0
        %942 = vmatmul.mubr.bf16.gmra.mrb[0].mxu0 %v896
        %v943 = vpop.f32.mrb[0].mxu0
        %v944 = vadd.f32 0.0, %v943
        %v945 = vpop.f32.mrb[0].mxu0
        %v946 = vpop.f32.mrb[0].mxu0
        %v947 = vadd.f32 0.0, %v946
        %v948 = vpop.f32.mrb[0].mxu0
        %949 = vdwg.mxu0
        %v950 = vadd.f32 %v881, %v936
        %v951 = vadd.f32 %v882, %v939
        %v952 = vadd.f32 %v883, %v944
        %v953 = vadd.f32 %v884, %v947
        %s954 = scalar_lea.vmem %s1, 22
        %v955 = vld [vmem:[%s954] sm:$0x3]
        %v956 = vrot.slane %v810, 1
        %v957 = vrot.slane %v812, 2
        %v958 = vor.u32 %v956, %v957
        %v959 = vrot.slane %v820, 1
        %v960 = vrot.slane %v816, 2
        %v961 = vor.u32 %v959, %v960
        %v962 = vsel %vm386, %v958, %v961
        %v964 = vsel %vm198, %v962, 0
        %v967 = vsel %vm198, %v961, 0
        %v970 = vsel %vm205, %v955, 0
        %972 = vmatprep.subr.bf16.mxu0 0
        %973 = vmatpush1.bf16.msra.mxu0 %v970
        %974 = vmatprep.subr.bf16.mxu0 0
        %975 = vmatpush1.bf16.msra.mxu0 0
        %976 = vmatprep.subr.bf16.mxu0 0
        %977 = vmatpush1.bf16.msra.mxu0 0
        %978 = vmatprep.subr.bf16.mxu0 0
        %979 = vmatpush1.bf16.msra.mxu0 0
        %980 = vmatprep.subr.bf16.mxu0 0
        %981 = vmatpush1.bf16.msra.mxu0 0
        %982 = vmatprep.subr.bf16.mxu0 0
        %983 = vmatpush1.bf16.msra.mxu0 0
        %984 = vmatprep.subr.bf16.mxu0 0
        %985 = vmatpush1.bf16.msra.mxu0 0
        %986 = vmatprep.subr.bf16.mxu0 0
        %987 = vmatpush1.bf16.msra.mxu0 0
        %988 = vmatprep.subr.bf16.mxu0 0
        %989 = vmatpush1.bf16.msra.mxu0 0
        %990 = vmatprep.subr.bf16.mxu0 0
        %991 = vmatpush1.bf16.msra.mxu0 0
        %992 = vmatprep.subr.bf16.mxu0 0
        %993 = vmatpush1.bf16.msra.mxu0 0
        %994 = vmatprep.subr.bf16.mxu0 0
        %995 = vmatpush1.bf16.msra.mxu0 0
        %996 = vmatprep.subr.bf16.mxu0 0
        %997 = vmatpush1.bf16.msra.mxu0 0
        %998 = vmatprep.subr.bf16.mxu0 0
        %999 = vmatpush1.bf16.msra.mxu0 0
        %1000 = vmatprep.subr.bf16.mxu0 0
        %1001 = vmatpush1.bf16.msra.mxu0 0
        %1002 = vmatprep.subr.bf16.mxu0 0
        %1003 = vmatpush1.bf16.msra.mxu0 0
        %1004 = vmatprep.mubr.bf16.mxu0 0
        %1005 = vmatmul.mubr.bf16.gmra.mrb[0].mxu0 %v964
        %v1006 = vpop.f32.mrb[0].mxu0
        %v1007 = vadd.f32 0.0, %v1006
        %v1008 = vpop.f32.mrb[0].mxu0
        %v1009 = vpop.f32.mrb[0].mxu0
        %v1010 = vadd.f32 0.0, %v1009
        %v1011 = vpop.f32.mrb[0].mxu0
        %1012 = vmatprep.mubr.bf16.mxu0 0
        %1013 = vmatmul.mubr.bf16.gmra.mrb[0].mxu0 %v967
        %v1014 = vpop.f32.mrb[0].mxu0
        %v1015 = vadd.f32 0.0, %v1014
        %v1016 = vpop.f32.mrb[0].mxu0
        %v1017 = vpop.f32.mrb[0].mxu0
        %v1018 = vadd.f32 0.0, %v1017
        %v1019 = vpop.f32.mrb[0].mxu0
        %1020 = vdwg.mxu0
        %v1021 = vadd.f32 %v950, %v1007
        %v1022 = vadd.f32 %v951, %v1010
        %v1023 = vadd.f32 %v952, %v1015
        %v1024 = vadd.f32 %v953, %v1018
        %s1025 = scalar_lea.vmem %s1, 24
        %v1026 = vld [vmem:[%s1025] sm:$0x3]
        %v1027 = vrot.slane %v742, 2
        %v1028 = vrot.slane %v743, 2
        %v1029 = vsel %vm458, %v1027, %v1028
        %v1031 = vsel %vm198, %v1029, 0
        %v1034 = vsel %vm198, %v1028, 0
        %v1037 = vsel %vm205, %v1026, 0
        %1039 = vmatprep.subr.bf16.mxu0 0
        %1040 = vmatpush1.bf16.msra.mxu0 %v1037
        %1041 = vmatprep.subr.bf16.mxu0 0
        %1042 = vmatpush1.bf16.msra.mxu0 0
        %1043 = vmatprep.subr.bf16.mxu0 0
        %1044 = vmatpush1.bf16.msra.mxu0 0
        %1045 = vmatprep.subr.bf16.mxu0 0
        %1046 = vmatpush1.bf16.msra.mxu0 0
        %1047 = vmatprep.subr.bf16.mxu0 0
        %1048 = vmatpush1.bf16.msra.mxu0 0
        %1049 = vmatprep.subr.bf16.mxu0 0
        %1050 = vmatpush1.bf16.msra.mxu0 0
        %1051 = vmatprep.subr.bf16.mxu0 0
        %1052 = vmatpush1.bf16.msra.mxu0 0
        %1053 = vmatprep.subr.bf16.mxu0 0
        %1054 = vmatpush1.bf16.msra.mxu0 0
        %1055 = vmatprep.subr.bf16.mxu0 0
        %1056 = vmatpush1.bf16.msra.mxu0 0
        %1057 = vmatprep.subr.bf16.mxu0 0
        %1058 = vmatpush1.bf16.msra.mxu0 0
        %1059 = vmatprep.subr.bf16.mxu0 0
        %1060 = vmatpush1.bf16.msra.mxu0 0
        %1061 = vmatprep.subr.bf16.mxu0 0
        %1062 = vmatpush1.bf16.msra.mxu0 0
        %1063 = vmatprep.subr.bf16.mxu0 0
        %1064 = vmatpush1.bf16.msra.mxu0 0
        %1065 = vmatprep.subr.bf16.mxu0 0
        %1066 = vmatpush1.bf16.msra.mxu0 0
        %1067 = vmatprep.subr.bf16.mxu0 0
        %1068 = vmatpush1.bf16.msra.mxu0 0
        %1069 = vmatprep.subr.bf16.mxu0 0
        %1070 = vmatpush1.bf16.msra.mxu0 0
        %1071 = vmatprep.mubr.bf16.mxu0 0
        %1072 = vmatmul.mubr.bf16.gmra.mrb[0].mxu0 %v1031
        %v1073 = vpop.f32.mrb[0].mxu0
        %v1074 = vadd.f32 0.0, %v1073
        %v1075 = vpop.f32.mrb[0].mxu0
        %v1076 = vpop.f32.mrb[0].mxu0
        %v1077 = vadd.f32 0.0, %v1076
        %v1078 = vpop.f32.mrb[0].mxu0
        %1079 = vmatprep.mubr.bf16.mxu0 0
        %1080 = vmatmul.mubr.bf16.gmra.mrb[0].mxu0 %v1034
        %v1081 = vpop.f32.mrb[0].mxu0
        %v1082 = vadd.f32 0.0, %v1081
        %v1083 = vpop.f32.mrb[0].mxu0
        %v1084 = vpop.f32.mrb[0].mxu0
        %v1085 = vadd.f32 0.0, %v1084
        %v1086 = vpop.f32.mrb[0].mxu0
        %1087 = vdwg.mxu0
        %v1088 = vadd.f32 %v1021, %v1074
        %v1089 = vadd.f32 %v1022, %v1077
        %v1090 = vadd.f32 %v1023, %v1082
        %v1091 = vadd.f32 %v1024, %v1085
        %s1092 = scalar_lea.vmem %s1, 26
        %v1093 = vld [vmem:[%s1092] sm:$0x3]
        %v1094 = vrot.slane %v810, 2
        %v1095 = vrot.slane %v812, 3
        %v1096 = vor.u32 %v1094, %v1095
        %v1097 = vrot.slane %v820, 2
        %v1098 = vrot.slane %v816, 3
        %v1099 = vor.u32 %v1097, %v1098
        %v1100 = vsel %vm526, %v1096, %v1099
        %v1102 = vsel %vm198, %v1100, 0
        %v1105 = vsel %vm198, %v1099, 0
        %v1108 = vsel %vm205, %v1093, 0
        %1110 = vmatprep.subr.bf16.mxu0 0
        %1111 = vmatpush1.bf16.msra.mxu0 %v1108
        %1112 = vmatprep.subr.bf16.mxu0 0
        %1113 = vmatpush1.bf16.msra.mxu0 0
        %1114 = vmatprep.subr.bf16.mxu0 0
        %1115 = vmatpush1.bf16.msra.mxu0 0
        %1116 = vmatprep.subr.bf16.mxu0 0
        %1117 = vmatpush1.bf16.msra.mxu0 0
        %1118 = vmatprep.subr.bf16.mxu0 0
        %1119 = vmatpush1.bf16.msra.mxu0 0
        %1120 = vmatprep.subr.bf16.mxu0 0
        %1121 = vmatpush1.bf16.msra.mxu0 0
        %1122 = vmatprep.subr.bf16.mxu0 0
        %1123 = vmatpush1.bf16.msra.mxu0 0
        %1124 = vmatprep.subr.bf16.mxu0 0
        %1125 = vmatpush1.bf16.msra.mxu0 0
        %1126 = vmatprep.subr.bf16.mxu0 0
        %1127 = vmatpush1.bf16.msra.mxu0 0
        %1128 = vmatprep.subr.bf16.mxu0 0
        %1129 = vmatpush1.bf16.msra.mxu0 0
        %1130 = vmatprep.subr.bf16.mxu0 0
        %1131 = vmatpush1.bf16.msra.mxu0 0
        %1132 = vmatprep.subr.bf16.mxu0 0
        %1133 = vmatpush1.bf16.msra.mxu0 0
        %1134 = vmatprep.subr.bf16.mxu0 0
        %1135 = vmatpush1.bf16.msra.mxu0 0
        %1136 = vmatprep.subr.bf16.mxu0 0
        %1137 = vmatpush1.bf16.msra.mxu0 0
        %1138 = vmatprep.subr.bf16.mxu0 0
        %1139 = vmatpush1.bf16.msra.mxu0 0
        %1140 = vmatprep.subr.bf16.mxu0 0
        %1141 = vmatpush1.bf16.msra.mxu0 0
        %1142 = vmatprep.mubr.bf16.mxu0 0
        %1143 = vmatmul.mubr.bf16.gmra.mrb[0].mxu0 %v1102
        %v1144 = vpop.f32.mrb[0].mxu0
        %v1145 = vadd.f32 0.0, %v1144
        %v1146 = vpop.f32.mrb[0].mxu0
        %v1147 = vpop.f32.mrb[0].mxu0
        %v1148 = vadd.f32 0.0, %v1147
        %v1149 = vpop.f32.mrb[0].mxu0
        %1150 = vmatprep.mubr.bf16.mxu0 0
        %1151 = vmatmul.mubr.bf16.gmra.mrb[0].mxu0 %v1105
        %v1152 = vpop.f32.mrb[0].mxu0
        %v1153 = vadd.f32 0.0, %v1152
        %v1154 = vpop.f32.mrb[0].mxu0
        %v1155 = vpop.f32.mrb[0].mxu0
        %v1156 = vadd.f32 0.0, %v1155
        %v1157 = vpop.f32.mrb[0].mxu0
        %1158 = vdwg.mxu0
        %v1159 = vadd.f32 %v1088, %v1145
        %v1160 = vadd.f32 %v1089, %v1148
        %v1161 = vadd.f32 %v1090, %v1153
        %v1162 = vadd.f32 %v1091, %v1156
        %s1163 = scalar_lea.vmem %s1, 28
        %v1164 = vld [vmem:[%s1163] sm:$0x3]
        %v1165 = vrot.slane %v742, 3
        %v1166 = vrot.slane %v743, 3
        %v1167 = vsel %vm598, %v1165, %v1166
        %v1169 = vsel %vm198, %v1167, 0
        %v1172 = vsel %vm198, %v1166, 0
        %v1175 = vsel %vm205, %v1164, 0
        %1177 = vmatprep.subr.bf16.mxu0 0
        %1178 = vmatpush1.bf16.msra.mxu0 %v1175
        %1179 = vmatprep.subr.bf16.mxu0 0
        %1180 = vmatpush1.bf16.msra.mxu0 0
        %1181 = vmatprep.subr.bf16.mxu0 0
        %1182 = vmatpush1.bf16.msra.mxu0 0
        %1183 = vmatprep.subr.bf16.mxu0 0
        %1184 = vmatpush1.bf16.msra.mxu0 0
        %1185 = vmatprep.subr.bf16.mxu0 0
        %1186 = vmatpush1.bf16.msra.mxu0 0
        %1187 = vmatprep.subr.bf16.mxu0 0
        %1188 = vmatpush1.bf16.msra.mxu0 0
        %1189 = vmatprep.subr.bf16.mxu0 0
        %1190 = vmatpush1.bf16.msra.mxu0 0
        %1191 = vmatprep.subr.bf16.mxu0 0
        %1192 = vmatpush1.bf16.msra.mxu0 0
        %1193 = vmatprep.subr.bf16.mxu0 0
        %1194 = vmatpush1.bf16.msra.mxu0 0
        %1195 = vmatprep.subr.bf16.mxu0 0
        %1196 = vmatpush1.bf16.msra.mxu0 0
        %1197 = vmatprep.subr.bf16.mxu0 0
        %1198 = vmatpush1.bf16.msra.mxu0 0
        %1199 = vmatprep.subr.bf16.mxu0 0
        %1200 = vmatpush1.bf16.msra.mxu0 0
        %1201 = vmatprep.subr.bf16.mxu0 0
        %1202 = vmatpush1.bf16.msra.mxu0 0
        %1203 = vmatprep.subr.bf16.mxu0 0
        %1204 = vmatpush1.bf16.msra.mxu0 0
        %1205 = vmatprep.subr.bf16.mxu0 0
        %1206 = vmatpush1.bf16.msra.mxu0 0
        %1207 = vmatprep.subr.bf16.mxu0 0
        %1208 = vmatpush1.bf16.msra.mxu0 0
        %1209 = vmatprep.mubr.bf16.mxu0 0
        %1210 = vmatmul.mubr.bf16.gmra.mrb[0].mxu0 %v1169
        %v1211 = vpop.f32.mrb[0].mxu0
        %v1212 = vadd.f32 0.0, %v1211
        %v1213 = vpop.f32.mrb[0].mxu0
        %v1214 = vpop.f32.mrb[0].mxu0
        %v1215 = vadd.f32 0.0, %v1214
        %v1216 = vpop.f32.mrb[0].mxu0
        %1217 = vmatprep.mubr.bf16.mxu0 0
        %1218 = vmatmul.mubr.bf16.gmra.mrb[0].mxu0 %v1172
        %v1219 = vpop.f32.mrb[0].mxu0
        %v1220 = vadd.f32 0.0, %v1219
        %v1221 = vpop.f32.mrb[0].mxu0
        %v1222 = vpop.f32.mrb[0].mxu0
        %v1223 = vadd.f32 0.0, %v1222
        %v1224 = vpop.f32.mrb[0].mxu0
        %1225 = vdwg.mxu0
        %v1226 = vadd.f32 %v1159, %v1212
        %v1227 = vadd.f32 %v1160, %v1215
        %v1228 = vadd.f32 %v1161, %v1220
        %v1229 = vadd.f32 %v1162, %v1223
        %v1230 = vpack.c.bf16 %v175, %v175
        %s1231 = scalar_lea.vmem %s1, 30
        %v1232 = vld [vmem:[%s1231] sm:$0x3]
        %v1233 = vrot.slane %v810, 3
        %v1234 = vrot.slane %v812, 4
        %v1235 = vor.u32 %v1233, %v1234
        %v1236 = vrot.slane %v820, 3
        %v1237 = vrot.slane %v816, 4
        %v1238 = vor.u32 %v1236, %v1237
        %v1239 = vsel %vm667, %v1235, %v1238
        %v1241 = vshll.u32 %v1230, 16
        %v1243 = vrot.slane %v1241, 4
        %v1244 = vsel %vm667, %v1238, %v1243
        %v1246 = vsel %vm198, %v1239, 0
        %v1249 = vsel %vm198, %v1244, 0
        %v1252 = vsel %vm205, %v1232, 0
        %1254 = vmatprep.subr.bf16.mxu0 0
        %1255 = vmatpush1.bf16.msra.mxu0 %v1252
        %1256 = vmatprep.subr.bf16.mxu0 0
        %1257 = vmatpush1.bf16.msra.mxu0 0
        %1258 = vmatprep.subr.bf16.mxu0 0
        %1259 = vmatpush1.bf16.msra.mxu0 0
        %1260 = vmatprep.subr.bf16.mxu0 0
        %1261 = vmatpush1.bf16.msra.mxu0 0
        %1262 = vmatprep.subr.bf16.mxu0 0
        %1263 = vmatpush1.bf16.msra.mxu0 0
        %1264 = vmatprep.subr.bf16.mxu0 0
        %1265 = vmatpush1.bf16.msra.mxu0 0
        %1266 = vmatprep.subr.bf16.mxu0 0
        %1267 = vmatpush1.bf16.msra.mxu0 0
        %1268 = vmatprep.subr.bf16.mxu0 0
        %1269 = vmatpush1.bf16.msra.mxu0 0
        %1270 = vmatprep.subr.bf16.mxu0 0
        %1271 = vmatpush1.bf16.msra.mxu0 0
        %1272 = vmatprep.subr.bf16.mxu0 0
        %1273 = vmatpush1.bf16.msra.mxu0 0
        %1274 = vmatprep.subr.bf16.mxu0 0
        %1275 = vmatpush1.bf16.msra.mxu0 0
        %1276 = vmatprep.subr.bf16.mxu0 0
        %1277 = vmatpush1.bf16.msra.mxu0 0
        %1278 = vmatprep.subr.bf16.mxu0 0
        %1279 = vmatpush1.bf16.msra.mxu0 0
        %1280 = vmatprep.subr.bf16.mxu0 0
        %1281 = vmatpush1.bf16.msra.mxu0 0
        %1282 = vmatprep.subr.bf16.mxu0 0
        %1283 = vmatpush1.bf16.msra.mxu0 0
        %1284 = vmatprep.subr.bf16.mxu0 0
        %1285 = vmatpush1.bf16.msra.mxu0 0
        %1286 = vmatprep.mubr.bf16.mxu0 0
        %1287 = vmatmul.mubr.bf16.gmra.mrb[0].mxu0 %v1246
        %v1288 = vpop.f32.mrb[0].mxu0
        %v1289 = vadd.f32 0.0, %v1288
        %v1290 = vpop.f32.mrb[0].mxu0
        %v1291 = vpop.f32.mrb[0].mxu0
        %v1292 = vadd.f32 0.0, %v1291
        %v1293 = vpop.f32.mrb[0].mxu0
        %1294 = vmatprep.mubr.bf16.mxu0 0
        %1295 = vmatmul.mubr.bf16.gmra.mrb[0].mxu0 %v1249
        %v1296 = vpop.f32.mrb[0].mxu0
        %v1297 = vadd.f32 0.0, %v1296
        %v1298 = vpop.f32.mrb[0].mxu0
        %v1299 = vpop.f32.mrb[0].mxu0
        %v1300 = vadd.f32 0.0, %v1299
        %v1301 = vpop.f32.mrb[0].mxu0
        %1302 = vdwg.mxu0
        %v1303 = vadd.f32 %v1226, %v1289
        %v1304 = vadd.f32 %v1227, %v1292
        %v1305 = vadd.f32 %v1228, %v1297
        %v1306 = vadd.f32 %v1229, %v1300
        %v1307 = vpack.c.bf16 %v175, %v174
        %s1308 = scalar_lea.vmem %s1, 32
        %v1309 = vld [vmem:[%s1308] sm:$0x3]
        %v1311 = vsel %vm198, %v1307, 0
        %v1314 = vsel %vm205, %v1309, 0
        %1316 = vmatprep.subr.bf16.mxu0 0
        %1317 = vmatpush1.bf16.msra.mxu0 %v1314
        %1318 = vmatprep.subr.bf16.mxu0 0
        %1319 = vmatpush1.bf16.msra.mxu0 0
        %1320 = vmatprep.subr.bf16.mxu0 0
        %1321 = vmatpush1.bf16.msra.mxu0 0
        %1322 = vmatprep.subr.bf16.mxu0 0
        %1323 = vmatpush1.bf16.msra.mxu0 0
        %1324 = vmatprep.subr.bf16.mxu0 0
        %1325 = vmatpush1.bf16.msra.mxu0 0
        %1326 = vmatprep.subr.bf16.mxu0 0
        %1327 = vmatpush1.bf16.msra.mxu0 0
        %1328 = vmatprep.subr.bf16.mxu0 0
        %1329 = vmatpush1.bf16.msra.mxu0 0
        %1330 = vmatprep.subr.bf16.mxu0 0
        %1331 = vmatpush1.bf16.msra.mxu0 0
        %1332 = vmatprep.subr.bf16.mxu0 0
        %1333 = vmatpush1.bf16.msra.mxu0 0
        %1334 = vmatprep.subr.bf16.mxu0 0
        %1335 = vmatpush1.bf16.msra.mxu0 0
        %1336 = vmatprep.subr.bf16.mxu0 0
        %1337 = vmatpush1.bf16.msra.mxu0 0
        %1338 = vmatprep.subr.bf16.mxu0 0
        %1339 = vmatpush1.bf16.msra.mxu0 0
        %1340 = vmatprep.subr.bf16.mxu0 0
        %1341 = vmatpush1.bf16.msra.mxu0 0
        %1342 = vmatprep.subr.bf16.mxu0 0
        %1343 = vmatpush1.bf16.msra.mxu0 0
        %1344 = vmatprep.subr.bf16.mxu0 0
        %1345 = vmatpush1.bf16.msra.mxu0 0
        %1346 = vmatprep.subr.bf16.mxu0 0
        %1347 = vmatpush1.bf16.msra.mxu0 0
        %1348 = vmatprep.mubr.bf16.mxu0 0
        %1349 = vmatmul.mubr.bf16.gmra.mrb[0].mxu0 %v260
        %v1350 = vpop.f32.mrb[0].mxu0
        %v1351 = vadd.f32 0.0, %v1350
        %v1352 = vpop.f32.mrb[0].mxu0
        %v1353 = vpop.f32.mrb[0].mxu0
        %v1354 = vadd.f32 0.0, %v1353
        %v1355 = vpop.f32.mrb[0].mxu0
        %1356 = vmatprep.mubr.bf16.mxu0 0
        %1357 = vmatmul.mubr.bf16.gmra.mrb[0].mxu0 %v1311
        %v1358 = vpop.f32.mrb[0].mxu0
        %v1359 = vadd.f32 0.0, %v1358
        %v1360 = vpop.f32.mrb[0].mxu0
        %v1361 = vpop.f32.mrb[0].mxu0
        %v1362 = vadd.f32 0.0, %v1361
        %v1363 = vpop.f32.mrb[0].mxu0
        %1364 = vdwg.mxu0
        %v1365 = vadd.f32 %v1303, %v1351
        %v1366 = vadd.f32 %v1304, %v1354
        %v1367 = vadd.f32 %v1305, %v1359
        %v1368 = vadd.f32 %v1306, %v1362
        %s1369 = scalar_lea.vmem %s1, 34
        %v1370 = vld [vmem:[%s1369] sm:$0x3]
        %v1371 = vshll.u32 %v1307, 16
        %v1373 = vrot.slane %v1371, 1
        %v1374 = vsel %vm182, %v197, %v1373
        %v1375 = vshrl.u32 %v1307, 16
        %v1377 = vor.u32 %v1375, %v1373
        %v1379 = vsel %vm198, %v1374, 0
        %v1382 = vsel %vm198, %v1377, 0
        %v1385 = vsel %vm205, %v1370, 0
        %1387 = vmatprep.subr.bf16.mxu0 0
        %1388 = vmatpush1.bf16.msra.mxu0 %v1385
        %1389 = vmatprep.subr.bf16.mxu0 0
        %1390 = vmatpush1.bf16.msra.mxu0 0
        %1391 = vmatprep.subr.bf16.mxu0 0
        %1392 = vmatpush1.bf16.msra.mxu0 0
        %1393 = vmatprep.subr.bf16.mxu0 0
        %1394 = vmatpush1.bf16.msra.mxu0 0
        %1395 = vmatprep.subr.bf16.mxu0 0
        %1396 = vmatpush1.bf16.msra.mxu0 0
        %1397 = vmatprep.subr.bf16.mxu0 0
        %1398 = vmatpush1.bf16.msra.mxu0 0
        %1399 = vmatprep.subr.bf16.mxu0 0
        %1400 = vmatpush1.bf16.msra.mxu0 0
        %1401 = vmatprep.subr.bf16.mxu0 0
        %1402 = vmatpush1.bf16.msra.mxu0 0
        %1403 = vmatprep.subr.bf16.mxu0 0
        %1404 = vmatpush1.bf16.msra.mxu0 0
        %1405 = vmatprep.subr.bf16.mxu0 0
        %1406 = vmatpush1.bf16.msra.mxu0 0
        %1407 = vmatprep.subr.bf16.mxu0 0
        %1408 = vmatpush1.bf16.msra.mxu0 0
        %1409 = vmatprep.subr.bf16.mxu0 0
        %1410 = vmatpush1.bf16.msra.mxu0 0
        %1411 = vmatprep.subr.bf16.mxu0 0
        %1412 = vmatpush1.bf16.msra.mxu0 0
        %1413 = vmatprep.subr.bf16.mxu0 0
        %1414 = vmatpush1.bf16.msra.mxu0 0
        %1415 = vmatprep.subr.bf16.mxu0 0
        %1416 = vmatpush1.bf16.msra.mxu0 0
        %1417 = vmatprep.subr.bf16.mxu0 0
        %1418 = vmatpush1.bf16.msra.mxu0 0
        %1419 = vmatprep.mubr.bf16.mxu0 0
        %1420 = vmatmul.mubr.bf16.gmra.mrb[0].mxu0 %v1379
        %v1421 = vpop.f32.mrb[0].mxu0
        %v1422 = vadd.f32 0.0, %v1421
        %v1423 = vpop.f32.mrb[0].mxu0
        %v1424 = vpop.f32.mrb[0].mxu0
        %v1425 = vadd.f32 0.0, %v1424
        %v1426 = vpop.f32.mrb[0].mxu0
        %1427 = vmatprep.mubr.bf16.mxu0 0
        %1428 = vmatmul.mubr.bf16.gmra.mrb[0].mxu0 %v1382
        %v1429 = vpop.f32.mrb[0].mxu0
        %v1430 = vadd.f32 0.0, %v1429
        %v1431 = vpop.f32.mrb[0].mxu0
        %v1432 = vpop.f32.mrb[0].mxu0
        %v1433 = vadd.f32 0.0, %v1432
        %v1434 = vpop.f32.mrb[0].mxu0
        %1435 = vdwg.mxu0
        %v1436 = vadd.f32 %v1365, %v1422
        %v1437 = vadd.f32 %v1366, %v1425
        %v1438 = vadd.f32 %v1367, %v1430
        %v1439 = vadd.f32 %v1368, %v1433
        %s1440 = scalar_lea.vmem %s1, 36
        %v1441 = vld [vmem:[%s1440] sm:$0x3]
        %v1443 = vrot.slane %v1307, 1
        %v1444 = vsel %vm318, %v320, %v1443
        %v1446 = vsel %vm198, %v1444, 0
        %v1449 = vsel %vm198, %v1443, 0
        %v1452 = vsel %vm205, %v1441, 0
        %1454 = vmatprep.subr.bf16.mxu0 0
        %1455 = vmatpush1.bf16.msra.mxu0 %v1452
        %1456 = vmatprep.subr.bf16.mxu0 0
        %1457 = vmatpush1.bf16.msra.mxu0 0
        %1458 = vmatprep.subr.bf16.mxu0 0
        %1459 = vmatpush1.bf16.msra.mxu0 0
        %1460 = vmatprep.subr.bf16.mxu0 0
        %1461 = vmatpush1.bf16.msra.mxu0 0
        %1462 = vmatprep.subr.bf16.mxu0 0
        %1463 = vmatpush1.bf16.msra.mxu0 0
        %1464 = vmatprep.subr.bf16.mxu0 0
        %1465 = vmatpush1.bf16.msra.mxu0 0
        %1466 = vmatprep.subr.bf16.mxu0 0
        %1467 = vmatpush1.bf16.msra.mxu0 0
        %1468 = vmatprep.subr.bf16.mxu0 0
        %1469 = vmatpush1.bf16.msra.mxu0 0
        %1470 = vmatprep.subr.bf16.mxu0 0
        %1471 = vmatpush1.bf16.msra.mxu0 0
        %1472 = vmatprep.subr.bf16.mxu0 0
        %1473 = vmatpush1.bf16.msra.mxu0 0
        %1474 = vmatprep.subr.bf16.mxu0 0
        %1475 = vmatpush1.bf16.msra.mxu0 0
        %1476 = vmatprep.subr.bf16.mxu0 0
        %1477 = vmatpush1.bf16.msra.mxu0 0
        %1478 = vmatprep.subr.bf16.mxu0 0
        %1479 = vmatpush1.bf16.msra.mxu0 0
        %1480 = vmatprep.subr.bf16.mxu0 0
        %1481 = vmatpush1.bf16.msra.mxu0 0
        %1482 = vmatprep.subr.bf16.mxu0 0
        %1483 = vmatpush1.bf16.msra.mxu0 0
        %1484 = vmatprep.subr.bf16.mxu0 0
        %1485 = vmatpush1.bf16.msra.mxu0 0
        %1486 = vmatprep.mubr.bf16.mxu0 0
        %1487 = vmatmul.mubr.bf16.gmra.mrb[0].mxu0 %v1446
        %v1488 = vpop.f32.mrb[0].mxu0
        %v1489 = vadd.f32 0.0, %v1488
        %v1490 = vpop.f32.mrb[0].mxu0
        %v1491 = vpop.f32.mrb[0].mxu0
        %v1492 = vadd.f32 0.0, %v1491
        %v1493 = vpop.f32.mrb[0].mxu0
        %1494 = vmatprep.mubr.bf16.mxu0 0
        %1495 = vmatmul.mubr.bf16.gmra.mrb[0].mxu0 %v1449
        %v1496 = vpop.f32.mrb[0].mxu0
        %v1497 = vadd.f32 0.0, %v1496
        %v1498 = vpop.f32.mrb[0].mxu0
        %v1499 = vpop.f32.mrb[0].mxu0
        %v1500 = vadd.f32 0.0, %v1499
        %v1501 = vpop.f32.mrb[0].mxu0
        %1502 = vdwg.mxu0
        %v1503 = vadd.f32 %v1436, %v1489
        %v1504 = vadd.f32 %v1437, %v1492
        %v1505 = vadd.f32 %v1438, %v1497
        %v1506 = vadd.f32 %v1439, %v1500
        %s1507 = scalar_lea.vmem %s1, 38
        %v1508 = vld [vmem:[%s1507] sm:$0x3]
        %v1509 = vrot.slane %v1375, 1
        %v1510 = vrot.slane %v1371, 2
        %v1511 = vor.u32 %v1509, %v1510
        %v1512 = vsel %vm386, %v392, %v1511
        %v1514 = vsel %vm198, %v1512, 0
        %v1517 = vsel %vm198, %v1511, 0
        %v1520 = vsel %vm205, %v1508, 0
        %1522 = vmatprep.subr.bf16.mxu0 0
        %1523 = vmatpush1.bf16.msra.mxu0 %v1520
        %1524 = vmatprep.subr.bf16.mxu0 0
        %1525 = vmatpush1.bf16.msra.mxu0 0
        %1526 = vmatprep.subr.bf16.mxu0 0
        %1527 = vmatpush1.bf16.msra.mxu0 0
        %1528 = vmatprep.subr.bf16.mxu0 0
        %1529 = vmatpush1.bf16.msra.mxu0 0
        %1530 = vmatprep.subr.bf16.mxu0 0
        %1531 = vmatpush1.bf16.msra.mxu0 0
        %1532 = vmatprep.subr.bf16.mxu0 0
        %1533 = vmatpush1.bf16.msra.mxu0 0
        %1534 = vmatprep.subr.bf16.mxu0 0
        %1535 = vmatpush1.bf16.msra.mxu0 0
        %1536 = vmatprep.subr.bf16.mxu0 0
        %1537 = vmatpush1.bf16.msra.mxu0 0
        %1538 = vmatprep.subr.bf16.mxu0 0
        %1539 = vmatpush1.bf16.msra.mxu0 0
        %1540 = vmatprep.subr.bf16.mxu0 0
        %1541 = vmatpush1.bf16.msra.mxu0 0
        %1542 = vmatprep.subr.bf16.mxu0 0
        %1543 = vmatpush1.bf16.msra.mxu0 0
        %1544 = vmatprep.subr.bf16.mxu0 0
        %1545 = vmatpush1.bf16.msra.mxu0 0
        %1546 = vmatprep.subr.bf16.mxu0 0
        %1547 = vmatpush1.bf16.msra.mxu0 0
        %1548 = vmatprep.subr.bf16.mxu0 0
        %1549 = vmatpush1.bf16.msra.mxu0 0
        %1550 = vmatprep.subr.bf16.mxu0 0
        %1551 = vmatpush1.bf16.msra.mxu0 0
        %1552 = vmatprep.subr.bf16.mxu0 0
        %1553 = vmatpush1.bf16.msra.mxu0 0
        %1554 = vmatprep.mubr.bf16.mxu0 0
        %1555 = vmatmul.mubr.bf16.gmra.mrb[0].mxu0 %v1514
        %v1556 = vpop.f32.mrb[0].mxu0
        %v1557 = vadd.f32 0.0, %v1556
        %v1558 = vpop.f32.mrb[0].mxu0
        %v1559 = vpop.f32.mrb[0].mxu0
        %v1560 = vadd.f32 0.0, %v1559
        %v1561 = vpop.f32.mrb[0].mxu0
        %1562 = vmatprep.mubr.bf16.mxu0 0
        %1563 = vmatmul.mubr.bf16.gmra.mrb[0].mxu0 %v1517
        %v1564 = vpop.f32.mrb[0].mxu0
        %v1565 = vadd.f32 0.0, %v1564
        %v1566 = vpop.f32.mrb[0].mxu0
        %v1567 = vpop.f32.mrb[0].mxu0
        %v1568 = vadd.f32 0.0, %v1567
        %v1569 = vpop.f32.mrb[0].mxu0
        %1570 = vdwg.mxu0
        %v1571 = vadd.f32 %v1503, %v1557
        %v1572 = vadd.f32 %v1504, %v1560
        %v1573 = vadd.f32 %v1505, %v1565
        %v1574 = vadd.f32 %v1506, %v1568
        %s1575 = scalar_lea.vmem %s1, 40
        %v1576 = vld [vmem:[%s1575] sm:$0x3]
        %v1577 = vrot.slane %v1307, 2
        %v1578 = vsel %vm458, %v460, %v1577
        %v1580 = vsel %vm198, %v1578, 0
        %v1583 = vsel %vm198, %v1577, 0
        %v1586 = vsel %vm205, %v1576, 0
        %1588 = vmatprep.subr.bf16.mxu0 0
        %1589 = vmatpush1.bf16.msra.mxu0 %v1586
        %1590 = vmatprep.subr.bf16.mxu0 0
        %1591 = vmatpush1.bf16.msra.mxu0 0
        %1592 = vmatprep.subr.bf16.mxu0 0
        %1593 = vmatpush1.bf16.msra.mxu0 0
        %1594 = vmatprep.subr.bf16.mxu0 0
        %1595 = vmatpush1.bf16.msra.mxu0 0
        %1596 = vmatprep.subr.bf16.mxu0 0
        %1597 = vmatpush1.bf16.msra.mxu0 0
        %1598 = vmatprep.subr.bf16.mxu0 0
        %1599 = vmatpush1.bf16.msra.mxu0 0
        %1600 = vmatprep.subr.bf16.mxu0 0
        %1601 = vmatpush1.bf16.msra.mxu0 0
        %1602 = vmatprep.subr.bf16.mxu0 0
        %1603 = vmatpush1.bf16.msra.mxu0 0
        %1604 = vmatprep.subr.bf16.mxu0 0
        %1605 = vmatpush1.bf16.msra.mxu0 0
        %1606 = vmatprep.subr.bf16.mxu0 0
        %1607 = vmatpush1.bf16.msra.mxu0 0
        %1608 = vmatprep.subr.bf16.mxu0 0
        %1609 = vmatpush1.bf16.msra.mxu0 0
        %1610 = vmatprep.subr.bf16.mxu0 0
        %1611 = vmatpush1.bf16.msra.mxu0 0
        %1612 = vmatprep.subr.bf16.mxu0 0
        %1613 = vmatpush1.bf16.msra.mxu0 0
        %1614 = vmatprep.subr.bf16.mxu0 0
        %1615 = vmatpush1.bf16.msra.mxu0 0
        %1616 = vmatprep.subr.bf16.mxu0 0
        %1617 = vmatpush1.bf16.msra.mxu0 0
        %1618 = vmatprep.subr.bf16.mxu0 0
        %1619 = vmatpush1.bf16.msra.mxu0 0
        %1620 = vmatprep.mubr.bf16.mxu0 0
        %1621 = vmatmul.mubr.bf16.gmra.mrb[0].mxu0 %v1580
        %v1622 = vpop.f32.mrb[0].mxu0
        %v1623 = vadd.f32 0.0, %v1622
        %v1624 = vpop.f32.mrb[0].mxu0
        %v1625 = vpop.f32.mrb[0].mxu0
        %v1626 = vadd.f32 0.0, %v1625
        %v1627 = vpop.f32.mrb[0].mxu0
        %1628 = vmatprep.mubr.bf16.mxu0 0
        %1629 = vmatmul.mubr.bf16.gmra.mrb[0].mxu0 %v1583
        %v1630 = vpop.f32.mrb[0].mxu0
        %v1631 = vadd.f32 0.0, %v1630
        %v1632 = vpop.f32.mrb[0].mxu0
        %v1633 = vpop.f32.mrb[0].mxu0
        %v1634 = vadd.f32 0.0, %v1633
        %v1635 = vpop.f32.mrb[0].mxu0
        %1636 = vdwg.mxu0
        %v1637 = vadd.f32 %v1571, %v1623
        %v1638 = vadd.f32 %v1572, %v1626
        %v1639 = vadd.f32 %v1573, %v1631
        %v1640 = vadd.f32 %v1574, %v1634
        %s1641 = scalar_lea.vmem %s1, 42
        %v1642 = vld [vmem:[%s1641] sm:$0x3]
        %v1643 = vrot.slane %v1375, 2
        %v1644 = vrot.slane %v1371, 3
        %v1645 = vor.u32 %v1643, %v1644
        %v1646 = vsel %vm526, %v532, %v1645
        %v1648 = vsel %vm198, %v1646, 0
        %v1651 = vsel %vm198, %v1645, 0
        %v1654 = vsel %vm205, %v1642, 0
        %1656 = vmatprep.subr.bf16.mxu0 0
        %1657 = vmatpush1.bf16.msra.mxu0 %v1654
        %1658 = vmatprep.subr.bf16.mxu0 0
        %1659 = vmatpush1.bf16.msra.mxu0 0
        %1660 = vmatprep.subr.bf16.mxu0 0
        %1661 = vmatpush1.bf16.msra.mxu0 0
        %1662 = vmatprep.subr.bf16.mxu0 0
        %1663 = vmatpush1.bf16.msra.mxu0 0
        %1664 = vmatprep.subr.bf16.mxu0 0
        %1665 = vmatpush1.bf16.msra.mxu0 0
        %1666 = vmatprep.subr.bf16.mxu0 0
        %1667 = vmatpush1.bf16.msra.mxu0 0
        %1668 = vmatprep.subr.bf16.mxu0 0
        %1669 = vmatpush1.bf16.msra.mxu0 0
        %1670 = vmatprep.subr.bf16.mxu0 0
        %1671 = vmatpush1.bf16.msra.mxu0 0
        %1672 = vmatprep.subr.bf16.mxu0 0
        %1673 = vmatpush1.bf16.msra.mxu0 0
        %1674 = vmatprep.subr.bf16.mxu0 0
        %1675 = vmatpush1.bf16.msra.mxu0 0
        %1676 = vmatprep.subr.bf16.mxu0 0
        %1677 = vmatpush1.bf16.msra.mxu0 0
        %1678 = vmatprep.subr.bf16.mxu0 0
        %1679 = vmatpush1.bf16.msra.mxu0 0
        %1680 = vmatprep.subr.bf16.mxu0 0
        %1681 = vmatpush1.bf16.msra.mxu0 0
        %1682 = vmatprep.subr.bf16.mxu0 0
        %1683 = vmatpush1.bf16.msra.mxu0 0
        %1684 = vmatprep.subr.bf16.mxu0 0
        %1685 = vmatpush1.bf16.msra.mxu0 0
        %1686 = vmatprep.subr.bf16.mxu0 0
        %1687 = vmatpush1.bf16.msra.mxu0 0
        %1688 = vmatprep.mubr.bf16.mxu0 0
        %1689 = vmatmul.mubr.bf16.gmra.mrb[0].mxu0 %v1648
        %v1690 = vpop.f32.mrb[0].mxu0
        %v1691 = vadd.f32 0.0, %v1690
        %v1692 = vpop.f32.mrb[0].mxu0
        %v1693 = vpop.f32.mrb[0].mxu0
        %v1694 = vadd.f32 0.0, %v1693
        %v1695 = vpop.f32.mrb[0].mxu0
        %1696 = vmatprep.mubr.bf16.mxu0 0
        %1697 = vmatmul.mubr.bf16.gmra.mrb[0].mxu0 %v1651
        %v1698 = vpop.f32.mrb[0].mxu0
        %v1699 = vadd.f32 0.0, %v1698
        %v1700 = vpop.f32.mrb[0].mxu0
        %v1701 = vpop.f32.mrb[0].mxu0
        %v1702 = vadd.f32 0.0, %v1701
        %v1703 = vpop.f32.mrb[0].mxu0
        %1704 = vdwg.mxu0
        %v1705 = vadd.f32 %v1637, %v1691
        %v1706 = vadd.f32 %v1638, %v1694
        %v1707 = vadd.f32 %v1639, %v1699
        %v1708 = vadd.f32 %v1640, %v1702
        %s1709 = scalar_lea.vmem %s1, 44
        %v1710 = vld [vmem:[%s1709] sm:$0x3]
        %v1711 = vrot.slane %v1307, 3
        %v1712 = vsel %vm598, %v600, %v1711
        %v1714 = vsel %vm198, %v1712, 0
        %v1717 = vsel %vm198, %v1711, 0
        %v1720 = vsel %vm205, %v1710, 0
        %1722 = vmatprep.subr.bf16.mxu0 0
        %1723 = vmatpush1.bf16.msra.mxu0 %v1720
        %1724 = vmatprep.subr.bf16.mxu0 0
        %1725 = vmatpush1.bf16.msra.mxu0 0
        %1726 = vmatprep.subr.bf16.mxu0 0
        %1727 = vmatpush1.bf16.msra.mxu0 0
        %1728 = vmatprep.subr.bf16.mxu0 0
        %1729 = vmatpush1.bf16.msra.mxu0 0
        %1730 = vmatprep.subr.bf16.mxu0 0
        %1731 = vmatpush1.bf16.msra.mxu0 0
        %1732 = vmatprep.subr.bf16.mxu0 0
        %1733 = vmatpush1.bf16.msra.mxu0 0
        %1734 = vmatprep.subr.bf16.mxu0 0
        %1735 = vmatpush1.bf16.msra.mxu0 0
        %1736 = vmatprep.subr.bf16.mxu0 0
        %1737 = vmatpush1.bf16.msra.mxu0 0
        %1738 = vmatprep.subr.bf16.mxu0 0
        %1739 = vmatpush1.bf16.msra.mxu0 0
        %1740 = vmatprep.subr.bf16.mxu0 0
        %1741 = vmatpush1.bf16.msra.mxu0 0
        %1742 = vmatprep.subr.bf16.mxu0 0
        %1743 = vmatpush1.bf16.msra.mxu0 0
        %1744 = vmatprep.subr.bf16.mxu0 0
        %1745 = vmatpush1.bf16.msra.mxu0 0
        %1746 = vmatprep.subr.bf16.mxu0 0
        %1747 = vmatpush1.bf16.msra.mxu0 0
        %1748 = vmatprep.subr.bf16.mxu0 0
        %1749 = vmatpush1.bf16.msra.mxu0 0
        %1750 = vmatprep.subr.bf16.mxu0 0
        %1751 = vmatpush1.bf16.msra.mxu0 0
        %1752 = vmatprep.subr.bf16.mxu0 0
        %1753 = vmatpush1.bf16.msra.mxu0 0
        %1754 = vmatprep.mubr.bf16.mxu0 0
        %1755 = vmatmul.mubr.bf16.gmra.mrb[0].mxu0 %v1714
        %v1756 = vpop.f32.mrb[0].mxu0
        %v1757 = vadd.f32 0.0, %v1756
        %v1758 = vpop.f32.mrb[0].mxu0
        %v1759 = vpop.f32.mrb[0].mxu0
        %v1760 = vadd.f32 0.0, %v1759
        %v1761 = vpop.f32.mrb[0].mxu0
        %1762 = vmatprep.mubr.bf16.mxu0 0
        %1763 = vmatmul.mubr.bf16.gmra.mrb[0].mxu0 %v1717
        %v1764 = vpop.f32.mrb[0].mxu0
        %v1765 = vadd.f32 0.0, %v1764
        %v1766 = vpop.f32.mrb[0].mxu0
        %v1767 = vpop.f32.mrb[0].mxu0
        %v1768 = vadd.f32 0.0, %v1767
        %v1769 = vpop.f32.mrb[0].mxu0
        %1770 = vdwg.mxu0
        %v1771 = vadd.f32 %v1705, %v1757
        %v1772 = vadd.f32 %v1706, %v1760
        %v1773 = vadd.f32 %v1707, %v1765
        %v1774 = vadd.f32 %v1708, %v1768
        %v1775 = vpack.c.bf16 %v176, %v176
        %s1776 = scalar_lea.vmem %s1, 46
        %v1777 = vld [vmem:[%s1776] sm:$0x3]
        %v1778 = vrot.slane %v1375, 3
        %v1779 = vrot.slane %v1371, 4
        %v1780 = vor.u32 %v1778, %v1779
        %v1781 = vsel %vm667, %v673, %v1780
        %v1783 = vshll.u32 %v1775, 16
        %v1785 = vrot.slane %v1783, 4
        %v1786 = vsel %vm667, %v1780, %v1785
        %v1788 = vsel %vm198, %v1781, 0
        %v1791 = vsel %vm198, %v1786, 0
        %v1794 = vsel %vm205, %v1777, 0
        %1796 = vmatprep.subr.bf16.mxu0 0
        %1797 = vmatpush1.bf16.msra.mxu0 %v1794
        %1798 = vmatprep.subr.bf16.mxu0 0
        %1799 = vmatpush1.bf16.msra.mxu0 0
        %1800 = vmatprep.subr.bf16.mxu0 0
        %1801 = vmatpush1.bf16.msra.mxu0 0
        %1802 = vmatprep.subr.bf16.mxu0 0
        %1803 = vmatpush1.bf16.msra.mxu0 0
        %1804 = vmatprep.subr.bf16.mxu0 0
        %1805 = vmatpush1.bf16.msra.mxu0 0
        %1806 = vmatprep.subr.bf16.mxu0 0
        %1807 = vmatpush1.bf16.msra.mxu0 0
        %1808 = vmatprep.subr.bf16.mxu0 0
        %1809 = vmatpush1.bf16.msra.mxu0 0
        %1810 = vmatprep.subr.bf16.mxu0 0
        %1811 = vmatpush1.bf16.msra.mxu0 0
        %1812 = vmatprep.subr.bf16.mxu0 0
        %1813 = vmatpush1.bf16.msra.mxu0 0
        %1814 = vmatprep.subr.bf16.mxu0 0
        %1815 = vmatpush1.bf16.msra.mxu0 0
        %1816 = vmatprep.subr.bf16.mxu0 0
        %1817 = vmatpush1.bf16.msra.mxu0 0
        %1818 = vmatprep.subr.bf16.mxu0 0
        %1819 = vmatpush1.bf16.msra.mxu0 0
        %1820 = vmatprep.subr.bf16.mxu0 0
        %1821 = vmatpush1.bf16.msra.mxu0 0
        %1822 = vmatprep.subr.bf16.mxu0 0
        %1823 = vmatpush1.bf16.msra.mxu0 0
        %1824 = vmatprep.subr.bf16.mxu0 0
        %1825 = vmatpush1.bf16.msra.mxu0 0
        %1826 = vmatprep.subr.bf16.mxu0 0
        %1827 = vmatpush1.bf16.msra.mxu0 0
        %1828 = vmatprep.mubr.bf16.mxu0 0
        %1829 = vmatmul.mubr.bf16.gmra.mrb[0].mxu0 %v1788
        %v1830 = vpop.f32.mrb[0].mxu0
        %v1831 = vadd.f32 0.0, %v1830
        %v1832 = vpop.f32.mrb[0].mxu0
        %v1833 = vpop.f32.mrb[0].mxu0
        %v1834 = vadd.f32 0.0, %v1833
        %v1835 = vpop.f32.mrb[0].mxu0
        %1836 = vmatprep.mubr.bf16.mxu0 0
        %1837 = vmatmul.mubr.bf16.gmra.mrb[0].mxu0 %v1791
        %v1838 = vpop.f32.mrb[0].mxu0
        %v1839 = vadd.f32 0.0, %v1838
        %v1840 = vpop.f32.mrb[0].mxu0
        %v1841 = vpop.f32.mrb[0].mxu0
        %v1842 = vadd.f32 0.0, %v1841
        %v1843 = vpop.f32.mrb[0].mxu0
        %1844 = vdwg.mxu0
        %v1845 = vadd.f32 %v1771, %v1831
        %v1846 = vadd.f32 %v1772, %v1834
        %v1847 = vadd.f32 %v1773, %v1839
        %v1848 = vadd.f32 %v1774, %v1842
        %v1849 = vpack.c.bf16 %v176, %v175
        %s1850 = scalar_lea.vmem %s1, 48
        %v1851 = vld [vmem:[%s1850] sm:$0x3]
        %v1853 = vsel %vm198, %v1849, 0
        %v1856 = vsel %vm205, %v1851, 0
        %1858 = vmatprep.subr.bf16.mxu0 0
        %1859 = vmatpush1.bf16.msra.mxu0 %v1856
        %1860 = vmatprep.subr.bf16.mxu0 0
        %1861 = vmatpush1.bf16.msra.mxu0 0
        %1862 = vmatprep.subr.bf16.mxu0 0
        %1863 = vmatpush1.bf16.msra.mxu0 0
        %1864 = vmatprep.subr.bf16.mxu0 0
        %1865 = vmatpush1.bf16.msra.mxu0 0
        %1866 = vmatprep.subr.bf16.mxu0 0
        %1867 = vmatpush1.bf16.msra.mxu0 0
        %1868 = vmatprep.subr.bf16.mxu0 0
        %1869 = vmatpush1.bf16.msra.mxu0 0
        %1870 = vmatprep.subr.bf16.mxu0 0
        %1871 = vmatpush1.bf16.msra.mxu0 0
        %1872 = vmatprep.subr.bf16.mxu0 0
        %1873 = vmatpush1.bf16.msra.mxu0 0
        %1874 = vmatprep.subr.bf16.mxu0 0
        %1875 = vmatpush1.bf16.msra.mxu0 0
        %1876 = vmatprep.subr.bf16.mxu0 0
        %1877 = vmatpush1.bf16.msra.mxu0 0
        %1878 = vmatprep.subr.bf16.mxu0 0
        %1879 = vmatpush1.bf16.msra.mxu0 0
        %1880 = vmatprep.subr.bf16.mxu0 0
        %1881 = vmatpush1.bf16.msra.mxu0 0
        %1882 = vmatprep.subr.bf16.mxu0 0
        %1883 = vmatpush1.bf16.msra.mxu0 0
        %1884 = vmatprep.subr.bf16.mxu0 0
        %1885 = vmatpush1.bf16.msra.mxu0 0
        %1886 = vmatprep.subr.bf16.mxu0 0
        %1887 = vmatpush1.bf16.msra.mxu0 0
        %1888 = vmatprep.subr.bf16.mxu0 0
        %1889 = vmatpush1.bf16.msra.mxu0 0
        %1890 = vmatprep.mubr.bf16.mxu0 0
        %1891 = vmatmul.mubr.bf16.gmra.mrb[0].mxu0 %v750
        %v1892 = vpop.f32.mrb[0].mxu0
        %v1893 = vadd.f32 0.0, %v1892
        %v1894 = vpop.f32.mrb[0].mxu0
        %v1895 = vpop.f32.mrb[0].mxu0
        %v1896 = vadd.f32 0.0, %v1895
        %v1897 = vpop.f32.mrb[0].mxu0
        %1898 = vmatprep.mubr.bf16.mxu0 0
        %1899 = vmatmul.mubr.bf16.gmra.mrb[0].mxu0 %v1853
        %v1900 = vpop.f32.mrb[0].mxu0
        %v1901 = vadd.f32 0.0, %v1900
        %v1902 = vpop.f32.mrb[0].mxu0
        %v1903 = vpop.f32.mrb[0].mxu0
        %v1904 = vadd.f32 0.0, %v1903
        %v1905 = vpop.f32.mrb[0].mxu0
        %1906 = vdwg.mxu0
        %v1907 = vadd.f32 %v1845, %v1893
        %v1908 = vadd.f32 %v1846, %v1896
        %v1909 = vadd.f32 %v1847, %v1901
        %v1910 = vadd.f32 %v1848, %v1904
        %s1911 = scalar_lea.vmem %s1, 50
        %v1912 = vld [vmem:[%s1911] sm:$0x3]
        %v1913 = vshll.u32 %v1849, 16
        %v1915 = vrot.slane %v1913, 1
        %v1916 = vsel %vm182, %v822, %v1915
        %v1917 = vshrl.u32 %v1849, 16
        %v1919 = vor.u32 %v1917, %v1915
        %v1921 = vsel %vm198, %v1916, 0
        %v1924 = vsel %vm198, %v1919, 0
        %v1927 = vsel %vm205, %v1912, 0
        %1929 = vmatprep.subr.bf16.mxu0 0
        %1930 = vmatpush1.bf16.msra.mxu0 %v1927
        %1931 = vmatprep.subr.bf16.mxu0 0
        %1932 = vmatpush1.bf16.msra.mxu0 0
        %1933 = vmatprep.subr.bf16.mxu0 0
        %1934 = vmatpush1.bf16.msra.mxu0 0
        %1935 = vmatprep.subr.bf16.mxu0 0
        %1936 = vmatpush1.bf16.msra.mxu0 0
        %1937 = vmatprep.subr.bf16.mxu0 0
        %1938 = vmatpush1.bf16.msra.mxu0 0
        %1939 = vmatprep.subr.bf16.mxu0 0
        %1940 = vmatpush1.bf16.msra.mxu0 0
        %1941 = vmatprep.subr.bf16.mxu0 0
        %1942 = vmatpush1.bf16.msra.mxu0 0
        %1943 = vmatprep.subr.bf16.mxu0 0
        %1944 = vmatpush1.bf16.msra.mxu0 0
        %1945 = vmatprep.subr.bf16.mxu0 0
        %1946 = vmatpush1.bf16.msra.mxu0 0
        %1947 = vmatprep.subr.bf16.mxu0 0
        %1948 = vmatpush1.bf16.msra.mxu0 0
        %1949 = vmatprep.subr.bf16.mxu0 0
        %1950 = vmatpush1.bf16.msra.mxu0 0
        %1951 = vmatprep.subr.bf16.mxu0 0
        %1952 = vmatpush1.bf16.msra.mxu0 0
        %1953 = vmatprep.subr.bf16.mxu0 0
        %1954 = vmatpush1.bf16.msra.mxu0 0
        %1955 = vmatprep.subr.bf16.mxu0 0
        %1956 = vmatpush1.bf16.msra.mxu0 0
        %1957 = vmatprep.subr.bf16.mxu0 0
        %1958 = vmatpush1.bf16.msra.mxu0 0
        %1959 = vmatprep.subr.bf16.mxu0 0
        %1960 = vmatpush1.bf16.msra.mxu0 0
        %1961 = vmatprep.mubr.bf16.mxu0 0
        %1962 = vmatmul.mubr.bf16.gmra.mrb[0].mxu0 %v1921
        %v1963 = vpop.f32.mrb[0].mxu0
        %v1964 = vadd.f32 0.0, %v1963
        %v1965 = vpop.f32.mrb[0].mxu0
        %v1966 = vpop.f32.mrb[0].mxu0
        %v1967 = vadd.f32 0.0, %v1966
        %v1968 = vpop.f32.mrb[0].mxu0
        %1969 = vmatprep.mubr.bf16.mxu0 0
        %1970 = vmatmul.mubr.bf16.gmra.mrb[0].mxu0 %v1924
        %v1971 = vpop.f32.mrb[0].mxu0
        %v1972 = vadd.f32 0.0, %v1971
        %v1973 = vpop.f32.mrb[0].mxu0
        %v1974 = vpop.f32.mrb[0].mxu0
        %v1975 = vadd.f32 0.0, %v1974
        %v1976 = vpop.f32.mrb[0].mxu0
        %1977 = vdwg.mxu0
        %v1978 = vadd.f32 %v1907, %v1964
        %v1979 = vadd.f32 %v1908, %v1967
        %v1980 = vadd.f32 %v1909, %v1972
        %v1981 = vadd.f32 %v1910, %v1975
        %v1982 = vld [vmem:[%s2] sm:$0x1]
        %v1984 = vlaneseq
        %v1985 = vshrl.u32 %v1984, 7
        %v1986 = vsub.s32 0, %v1985
        %v1987 = vrot.slane %v1982, %v1986
        %v1989 = vadd.f32 %v1978, %v1987
        %v1990 = vadd.f32 %v1979, %v1987
        %v1991 = vadd.f32 %v1980, %v1987
        %v1992 = vadd.f32 %v1981, %v1987
        %v1993 = vmax.f32 %v1989, 0.0
        %v1994 = vmax.f32 %v1990, 0.0
        %v1995 = vmax.f32 %v1991, 0.0
        %v1996 = vmax.f32 %v1992, 0.0
        %vm1997 = vcmask 64512
        %1998 = vst.msk [vmem:[#allocation2] sm:$0xff] %vm1997, %v1993
        %1999 = vst.msk [vmem:[#allocation2 + $0x8] sm:$0xff] %vm1997, %v1994
        %2000 = vst.msk [vmem:[#allocation2 + $0x10] sm:$0xff] %vm1997, %v1995
        %vm2001 = vcmask 58368
        %2002 = vst.msk [vmem:[#allocation2 + $0x18] sm:$0x3] %vm2001, %v1996
        %v2003 = vld [vmem:[#allocation2] ss:$13 sm:$0x3]
        %s2004 = scalar_lea.vmem [#allocation2], 1
        %v2005 = vld [vmem:[%s2004] ss:$13 sm:$0x3]
        %v2006 = vmax.f32 %v2003, %v2005
        %s2007 = scalar_lea.vmem [#allocation2], 2
        %v2008 = vld [vmem:[%s2007] ss:$13 sm:$0x3]
        %v2009 = vmax.f32 %v2006, %v2008
        %s2010 = scalar_lea.vmem [#allocation2], 3
        %v2011 = vld [vmem:[%s2010] ss:$13 sm:$0x3]
        %v2012 = vmax.f32 %v2009, %v2011
        %s2013 = scalar_lea.vmem [#allocation2], 4
        %v2014 = vld [vmem:[%s2013] ss:$13 sm:$0x3]
        %v2015 = vmax.f32 %v2012, %v2014
        %s2016 = scalar_lea.vmem [#allocation2], 5
        %v2017 = vld [vmem:[%s2016] ss:$13 sm:$0x3]
        %v2018 = vmax.f32 %v2015, %v2017
        %s2019 = scalar_lea.vmem [#allocation2], 6
        %v2020 = vld [vmem:[%s2019] ss:$13 sm:$0x3]
        %v2021 = vmax.f32 %v2018, %v2020
        %s2022 = scalar_lea.vmem [#allocation2], 7
        %v2023 = vld [vmem:[%s2022] ss:$13 sm:$0x3]
        %v2024 = vmax.f32 %v2021, %v2023
        %s2025 = scalar_lea.vmem [#allocation2], 8
        %v2026 = vld [vmem:[%s2025] ss:$13 sm:$0x3]
        %v2027 = vmax.f32 %v2024, %v2026
        %s2028 = scalar_lea.vmem [#allocation2], 9
        %v2029 = vld [vmem:[%s2028] ss:$13 sm:$0x3]
        %v2030 = vmax.f32 %v2027, %v2029
        %s2031 = scalar_lea.vmem [#allocation2], 10
        %v2032 = vld [vmem:[%s2031] ss:$13 sm:$0x3]
        %v2033 = vmax.f32 %v2030, %v2032
        %s2034 = scalar_lea.vmem [#allocation2], 11
        %v2035 = vld [vmem:[%s2034] ss:$13 sm:$0x3]
        %v2036 = vmax.f32 %v2033, %v2035
        %s2037 = scalar_lea.vmem [#allocation2], 12
        %v2038 = vld [vmem:[%s2037] ss:$13 sm:$0x3]
        %v2039 = vmax.f32 %v2036, %v2038
        %2040 = vst.msk [vmem:[%s163] sm:$0x3] %vm2001, %v2039
        %s2041 = sand.u32 %s93, 1
        %s2042 = scalar_lea.sflag [#allocation4], %s2041
        %s2043 = sand.u32 %s93, 1
        %s2044 = smul.addr %s2043, 2
        %s2045 = scalar_lea.vmem [#allocation3], %s2044
        // Predicated region
        $region33: #{tpu_custom_call.1} parent=31 // pred_check
          %p2046 = pneg %p103
        $region34: #{tpu_custom_call.1} parent=31 // pred_check_branch
          %2048 = sbr.rel (%p2046) target = $region36
        $region35: #{tpu_custom_call.1} parent=31 // pred_region
          %s2050 = ssub.s32 32, 32
          %2051 = vsyncadd %s2042, %s2050
          %s2052 = smul.addr %s17, 32
          %s2053 = scalar_lea.hbm %s3, %s2052
          %s2055 = sshll.u32 %s2045, 4
          %s2056 = int_to_ptr.vmem [resolvable:$true] %s2055
          %2058 = dma.vmem_to_hbm [thread:$0]  %s2056, 32, %s2053, %s2042
        $region36: #{tpu_custom_call.1} parent=31 // pred_fallthru
          _
      $region32: #{tpu_custom_call.1} parent=5 // pred_fallthru
        _
      %p2059 = scmp.le.s32.totalorder 2, %s12
      // Predicated region
      $region37: #{tpu_custom_call.1} parent=5 // pred_check
        %p2060 = pneg %p2059
      $region38: #{tpu_custom_call.1} parent=5 // pred_check_branch
        %2062 = sbr.rel (%p2060) target = $region40
      $region39: #{tpu_custom_call.1} parent=5 // pred_region
        %s2063 = ssub.s32 %s12, 2
        // Predicated region
        $region41: #{tpu_custom_call.1} parent=39 // pred_check
          %p2064 = pneg %p109
        $region42: #{tpu_custom_call.1} parent=39 // pred_check_branch
          %2066 = sbr.rel (%p2064) target = $region44
        $region43: #{tpu_custom_call.1} parent=39 // pred_region
          %s2067 = sand.u32 %s94, 1
          %s2068 = scalar_lea.sflag [#allocation4], %s2067
          %s2069 = sand.u32 %s94, 1
          %s2070 = smul.addr %s2069, 2
          %s2071 = scalar_lea.vmem [#allocation3], %s2070
          %2072 = dma.done %s2068, 32
        $region44: #{tpu_custom_call.1} parent=39 // pred_fallthru
          _
      $region40: #{tpu_custom_call.1} parent=5 // pred_fallthru
        _
    $region6: #{tpu_custom_call.1} parent=1 // loop_footer
      %s16 = sadd.s32 1, %s12
    $region7: #{tpu_custom_call.1} parent=1 // loop_footer_branch
      %11 = sbr.rel target = $region3
    $region8: #{tpu_custom_call.1} parent=1 // loop_exit
      _
    %2073 = vsyncpa [#allocation4], 1
    %s2074 = scalar_lea.sflag [#allocation4], 1
    %2075 = vsyncpa %s2074, 1

</llo_original>
